<compile_context>
chip_gen: v7x
topology: tpu7x:2x2x1
jax: 0.10.0
libtpu: 0.0.40
codegen_flags: <defaults>
</compile_context>

<pallas_src>
import functools

import jax
import jax.numpy as jnp
from jax import lax
from jax.experimental import pallas as pl
from jax.experimental.pallas import tpu as pltpu

HEADS = 8
DIM_HEAD = 64
INNER = HEADS * DIM_HEAD          # 512
SCALE = DIM_HEAD ** -0.5          # 0.125, exact in bf16/f32


# ---------------------------------------------------------------------------
# Fused per-batch kernel: Cross_Attention on (N, D) tokens + mlp_projector.
# ---------------------------------------------------------------------------
def _sffr_batch_kernel(x_ref, wqkv_ref, wout_ref, px_ref, wproj_ref,
                       attn_o_ref, proj_o_ref, *, N):
    # x_ref:     (1, N, D)     attention tokens for this batch (caller dtype)
    # wqkv_ref:  (D, 3*INNER)  Q third pre-scaled by dim_head**-0.5
    # wout_ref:  (INNER, D)
    # px_ref:    (1, T, F)     projector tokens for this batch
    # wproj_ref: (F, F)
    x = x_ref[0]                                            # (N, D)
    wqkv = wqkv_ref[...]
    wout = wout_ref[...]

    # QKV projection: f32 accumulate, then back to the operand dtype so the
    # score / attn@V matmuls use the bf16 MXU path when inputs are bf16.
    qkv = jnp.dot(x, wqkv, preferred_element_type=jnp.float32).astype(x.dtype)

    # ---- scores: per-head Q_h @ K_h^T (rhs contracting dim 1 -> transposed-
    # RHS MXU path, no explicit transpose), lane-packed across heads. ----
    s_blocks = []
    for h in range(HEADS):                                  # heads fixed at 8
        c = h * DIM_HEAD
        qh = qkv[:, c:c + DIM_HEAD]                         # (N, dh), scaled
        kh = qkv[:, INNER + c:INNER + c + DIM_HEAD]         # (N, dh)
        s_blocks.append(lax.dot_general(
            qh, kh, (((1,), (1,)), ((), ())),
            preferred_element_type=jnp.float32))            # (N_q, N_k)
    sp = jnp.concatenate(s_blocks, axis=-1)                 # (N, HEADS*N) f32

    # ---- one lane-dense exp pass; a per-row global max is a valid
    # stabilizer for every head (softmax is shift-invariant per row). ----
    e = jnp.exp(sp - jnp.max(sp, axis=-1, keepdims=True))   # (N, HEADS*N) f32

    # ---- per-head attn@V, lane-packed into an (N, INNER) slab, then one
    # 512-deep output projection (full MXU K fill, no per-head f32 adds).
    # Normalization (1/rowsum) stays f32 and is applied per head. ----
    o_blocks = []
    for h in range(HEADS):
        c = h * DIM_HEAD
        e_h = e[:, h * N:(h + 1) * N]                       # (N_q, N_k) f32
        r_h = pl.reciprocal(jnp.sum(e_h, axis=-1, keepdims=True), approx=True)
        vh = qkv[:, 2 * INNER + c:2 * INNER + c + DIM_HEAD]  # (N_k, dh)
        o_h = jnp.dot(e_h.astype(x.dtype), vh,
                      preferred_element_type=jnp.float32)    # (N_q, dh) f32
        o_blocks.append(o_h * r_h)                          # normalize in f32
    o = jnp.concatenate(o_blocks, axis=-1).astype(wout.dtype)  # (N, INNER)
    attn_o_ref[0] = jnp.dot(
        o, wout, preferred_element_type=jnp.float32).astype(attn_o_ref.dtype)

    # ---- mlp_projector for this batch's tokens (same launch / pipeline) ----
    proj_o_ref[0] = jnp.dot(
        px_ref[0], wproj_ref[...],
        preferred_element_type=jnp.float32).astype(proj_o_ref.dtype)


def sffr_fused(old_msg_state, w_qkv, w_out, proj_x, w_proj):
    """Fused FusionHistoryFeatures hot path.

    old_msg_state: (B, N, D); w_qkv: (D, 3*INNER); w_out: (INNER, D)
    proj_x:        (B, T, F); w_proj: (F, F)
    Returns (msg_state (B, N, D), projected (B, T, F)).
    """
    B, N, D = old_msg_state.shape
    Bp, T, F = proj_x.shape
    assert Bp == B
    assert w_qkv.shape == (D, 3 * INNER) and w_out.shape == (INNER, D)
    assert w_proj.shape == (F, F)

    # Fold the attention scale into the Q third of Wqkv (one-time static
    # weight transform; SCALE = 0.125 so it is exact in bf16 and f32).
    w_qkv_scaled = jnp.concatenate(
        [w_qkv[:, :INNER] * jnp.asarray(SCALE, w_qkv.dtype), w_qkv[:, INNER:]],
        axis=-1)

    kernel = functools.partial(_sffr_batch_kernel, N=N)
    msg_state, projected = pl.pallas_call(
        kernel,
        out_shape=(jax.ShapeDtypeStruct((B, N, D), old_msg_state.dtype),
                   jax.ShapeDtypeStruct((B, T, F), proj_x.dtype)),
        grid=(B,),
        in_specs=[
            pl.BlockSpec((1, N, D), lambda b: (b, 0, 0)),
            pl.BlockSpec((D, 3 * INNER), lambda b: (0, 0)),   # resident weight
            pl.BlockSpec((INNER, D), lambda b: (0, 0)),       # resident weight
            pl.BlockSpec((1, T, F), lambda b: (b, 0, 0)),
            pl.BlockSpec((F, F), lambda b: (0, 0)),           # resident weight
        ],
        out_specs=(
            pl.BlockSpec((1, N, D), lambda b: (b, 0, 0)),
            pl.BlockSpec((1, T, F), lambda b: (b, 0, 0)),
        ),
        compiler_params=pltpu.CompilerParams(
            dimension_semantics=("parallel",)),               # v7x: 2nd TC
    )(old_msg_state, w_qkv_scaled, w_out, proj_x, w_proj)
    return msg_state, projected


# ---------------------------------------------------------------------------
# Pure-JAX references (correctness check only; math done in f32).
# ---------------------------------------------------------------------------
def cross_attention_ref(x, w_qkv, w_out):
    x = x.astype(jnp.float32)
    qkv = x @ w_qkv.astype(jnp.float32)
    q, k, v = jnp.split(qkv, 3, axis=-1)

    def heads(t):
        B, N, _ = t.shape
        return t.reshape(B, N, HEADS, DIM_HEAD).transpose(0, 2, 1, 3)

    q, k, v = map(heads, (q, k, v))
    dots = jnp.einsum("bhnd,bhmd->bhnm", q, k) * SCALE
    attn = jax.nn.softmax(dots, axis=-1)
    out = jnp.einsum("bhnm,bhmd->bhnd", attn, v)
    B_, _, N_, _ = out.shape
    out = out.transpose(0, 2, 1, 3).reshape(B_, N_, INNER)
    return out @ w_out.astype(jnp.float32)


def projector_ref(x, w_proj):
    return x.astype(jnp.float32) @ w_proj.astype(jnp.float32)


if __name__ == "__main__":
    key = jax.random.PRNGKey(0)
    k_x, k_qkv, k_out, k_px, k_pw = jax.random.split(key, 5)

    # Small module-consistent shapes. Cross_Attention defaults fix heads=8,
    # dim_head=64 -> inner=512; state_dim / feature_dim are module params.
    B, N, STATE_DIM = 2, 8, 128        # attention input  (B, N, state_dim)
    T, FEATURE_DIM = 8, 128            # projector input  (B, T, feature_dim)

    old_msg_state = jax.random.normal(k_x, (B, N, STATE_DIM), jnp.float32)
    w_qkv = 0.02 * jax.random.normal(k_qkv, (STATE_DIM, 3 * INNER), jnp.float32)
    w_out = 0.02 * jax.random.normal(k_out, (INNER, STATE_DIM), jnp.float32)
    proj_x = jax.random.normal(k_px, (B, T, FEATURE_DIM), jnp.float32)
    w_proj = 0.02 * jax.random.normal(k_pw, (FEATURE_DIM, FEATURE_DIM), jnp.float32)

    # ---- f32 path (softmax denominator uses the EUP approx reciprocal, so
    # the attention tolerance is 1e-2; the projector stays exact-ish). ----
    msg_state, projected = sffr_fused(old_msg_state, w_qkv, w_out, proj_x, w_proj)
    msg_state, projected = jax.block_until_ready((msg_state, projected))

    ref_attn = cross_attention_ref(old_msg_state, w_qkv, w_out)
    ref_proj = projector_ref(proj_x, w_proj)
    assert jnp.allclose(msg_state, ref_attn, rtol=1e-2, atol=1e-2), \
        "attention mismatch (f32)"
    assert jnp.allclose(projected, ref_proj, rtol=1e-4, atol=1e-4), \
        "projector mismatch (f32)"

    # Host-side SFFR glue: memory.merge_msg_states[-1] = msg_state[:, -1:, :]
    merged_last = msg_state[:, -1:, :]
    assert merged_last.shape == (B, 1, STATE_DIM)

    # ---- bf16 path (bf16 MXU operands on v6e/v7x, f32 softmax/accumulate) ----
    bf = jnp.bfloat16
    msg_bf, proj_bf = sffr_fused(old_msg_state.astype(bf), w_qkv.astype(bf),
                                 w_out.astype(bf), proj_x.astype(bf),
                                 w_proj.astype(bf))
    msg_bf, proj_bf = jax.block_until_ready((msg_bf, proj_bf))
    ref_attn_bf = cross_attention_ref(old_msg_state.astype(bf), w_qkv.astype(bf),
                                      w_out.astype(bf))
    ref_proj_bf = projector_ref(proj_x.astype(bf), w_proj.astype(bf))
    assert jnp.allclose(msg_bf.astype(jnp.float32), ref_attn_bf,
                        rtol=2e-2, atol=2e-2), "attention mismatch (bf16)"
    assert jnp.allclose(proj_bf.astype(jnp.float32), ref_proj_bf,
                        rtol=2e-2, atol=2e-2), "projector mismatch (bf16)"

    print("KERNEL_OK")
</pallas_src>

<mosaic_0001>
module attributes {stable_mosaic.version = 11 : i64} {
  func.func @_sffr_batch_kernel(%arg0: i32, %arg1: memref<1x8x128xf32, #tpu.memory_space<vmem>>, %arg2: memref<128x1536xf32, #tpu.memory_space<vmem>>, %arg3: memref<512x128xf32, #tpu.memory_space<vmem>>, %arg4: memref<1x8x128xf32, #tpu.memory_space<vmem>>, %arg5: memref<128x128xf32, #tpu.memory_space<vmem>>, %arg6: memref<1x8x128xf32, #tpu.memory_space<vmem>>, %arg7: memref<1x8x128xf32, #tpu.memory_space<vmem>>) attributes {dimension_semantics = [#tpu.dimension_semantics<parallel>], iteration_bounds = array<i64: 2>, scalar_prefetch = 0 : i64, scratch_operands = 0 : i64, tpu.core_type = #tpu.core_type<tc>, window_params = [{transform_indices = @transform_0, window_bounds = array<i64: 1, 8, 128>}, {pipeline_mode = #tpu.pipeline_mode<synchronous>, transform_indices = @transform_1, window_bounds = array<i64: 128, 1536>}, {pipeline_mode = #tpu.pipeline_mode<synchronous>, transform_indices = @transform_2, window_bounds = array<i64: 512, 128>}, {transform_indices = @transform_3, window_bounds = array<i64: 1, 8, 128>}, {pipeline_mode = #tpu.pipeline_mode<synchronous>, transform_indices = @transform_4, window_bounds = array<i64: 128, 128>}, {transform_indices = @transform_5, window_bounds = array<i64: 1, 8, 128>}, {transform_indices = @transform_6, window_bounds = array<i64: 1, 8, 128>}]} {
    %c0 = arith.constant 0 : index
    %c0_0 = arith.constant 0 : index
    %c0_1 = arith.constant 0 : index
    %0 = vector.load %arg1[%c0, %c0_0, %c0_1] : memref<1x8x128xf32, #tpu.memory_space<vmem>>, vector<1x8x128xf32>
    %1 = vector.shape_cast %0 : vector<1x8x128xf32> to vector<8x128xf32>
    %c0_2 = arith.constant 0 : index
    %c0_3 = arith.constant 0 : index
    %2 = vector.load %arg2[%c0_2, %c0_3] : memref<128x1536xf32, #tpu.memory_space<vmem>>, vector<128x1536xf32>
    %c0_4 = arith.constant 0 : index
    %c0_5 = arith.constant 0 : index
    %3 = vector.load %arg3[%c0_4, %c0_5] : memref<512x128xf32, #tpu.memory_space<vmem>>, vector<512x128xf32>
    %cst = arith.constant dense<0.000000e+00> : vector<8x1536xf32>
    %4 = tpu.matmul %1, %2, %cst {dimension_numbers = #tpu.dot_dimension_numbers<[1], [0], [0], [1], [0, 0, 1, 1], [], []>} : vector<8x128xf32>, vector<128x1536xf32>, vector<8x1536xf32> -> vector<8x1536xf32>
    %5 = vector.extract_strided_slice %4 {offsets = [0, 0], sizes = [8, 64], strides = [1, 1]} : vector<8x1536xf32> to vector<8x64xf32>
    %6 = vector.extract_strided_slice %4 {offsets = [0, 512], sizes = [8, 64], strides = [1, 1]} : vector<8x1536xf32> to vector<8x64xf32>
    %cst_6 = arith.constant dense<0.000000e+00> : vector<8x8xf32>
    %7 = tpu.matmul %5, %6, %cst_6 {dimension_numbers = #tpu.dot_dimension_numbers<[1], [1], [0], [0], [0, 0, 1, 0], [], []>} : vector<8x64xf32>, vector<8x64xf32>, vector<8x8xf32> -> vector<8x8xf32>
    %8 = vector.extract_strided_slice %4 {offsets = [0, 64], sizes = [8, 64], strides = [1, 1]} : vector<8x1536xf32> to vector<8x64xf32>
    %9 = vector.extract_strided_slice %4 {offsets = [0, 576], sizes = [8, 64], strides = [1, 1]} : vector<8x1536xf32> to vector<8x64xf32>
    %cst_7 = arith.constant dense<0.000000e+00> : vector<8x8xf32>
    %10 = tpu.matmul %8, %9, %cst_7 {dimension_numbers = #tpu.dot_dimension_numbers<[1], [1], [0], [0], [0, 0, 1, 0], [], []>} : vector<8x64xf32>, vector<8x64xf32>, vector<8x8xf32> -> vector<8x8xf32>
    %11 = vector.extract_strided_slice %4 {offsets = [0, 128], sizes = [8, 64], strides = [1, 1]} : vector<8x1536xf32> to vector<8x64xf32>
    %12 = vector.extract_strided_slice %4 {offsets = [0, 640], sizes = [8, 64], strides = [1, 1]} : vector<8x1536xf32> to vector<8x64xf32>
    %cst_8 = arith.constant dense<0.000000e+00> : vector<8x8xf32>
    %13 = tpu.matmul %11, %12, %cst_8 {dimension_numbers = #tpu.dot_dimension_numbers<[1], [1], [0], [0], [0, 0, 1, 0], [], []>} : vector<8x64xf32>, vector<8x64xf32>, vector<8x8xf32> -> vector<8x8xf32>
    %14 = vector.extract_strided_slice %4 {offsets = [0, 192], sizes = [8, 64], strides = [1, 1]} : vector<8x1536xf32> to vector<8x64xf32>
    %15 = vector.extract_strided_slice %4 {offsets = [0, 704], sizes = [8, 64], strides = [1, 1]} : vector<8x1536xf32> to vector<8x64xf32>
    %cst_9 = arith.constant dense<0.000000e+00> : vector<8x8xf32>
    %16 = tpu.matmul %14, %15, %cst_9 {dimension_numbers = #tpu.dot_dimension_numbers<[1], [1], [0], [0], [0, 0, 1, 0], [], []>} : vector<8x64xf32>, vector<8x64xf32>, vector<8x8xf32> -> vector<8x8xf32>
    %17 = vector.extract_strided_slice %4 {offsets = [0, 256], sizes = [8, 64], strides = [1, 1]} : vector<8x1536xf32> to vector<8x64xf32>
    %18 = vector.extract_strided_slice %4 {offsets = [0, 768], sizes = [8, 64], strides = [1, 1]} : vector<8x1536xf32> to vector<8x64xf32>
    %cst_10 = arith.constant dense<0.000000e+00> : vector<8x8xf32>
    %19 = tpu.matmul %17, %18, %cst_10 {dimension_numbers = #tpu.dot_dimension_numbers<[1], [1], [0], [0], [0, 0, 1, 0], [], []>} : vector<8x64xf32>, vector<8x64xf32>, vector<8x8xf32> -> vector<8x8xf32>
    %20 = vector.extract_strided_slice %4 {offsets = [0, 320], sizes = [8, 64], strides = [1, 1]} : vector<8x1536xf32> to vector<8x64xf32>
    %21 = vector.extract_strided_slice %4 {offsets = [0, 832], sizes = [8, 64], strides = [1, 1]} : vector<8x1536xf32> to vector<8x64xf32>
    %cst_11 = arith.constant dense<0.000000e+00> : vector<8x8xf32>
    %22 = tpu.matmul %20, %21, %cst_11 {dimension_numbers = #tpu.dot_dimension_numbers<[1], [1], [0], [0], [0, 0, 1, 0], [], []>} : vector<8x64xf32>, vector<8x64xf32>, vector<8x8xf32> -> vector<8x8xf32>
    %23 = vector.extract_strided_slice %4 {offsets = [0, 384], sizes = [8, 64], strides = [1, 1]} : vector<8x1536xf32> to vector<8x64xf32>
    %24 = vector.extract_strided_slice %4 {offsets = [0, 896], sizes = [8, 64], strides = [1, 1]} : vector<8x1536xf32> to vector<8x64xf32>
    %cst_12 = arith.constant dense<0.000000e+00> : vector<8x8xf32>
    %25 = tpu.matmul %23, %24, %cst_12 {dimension_numbers = #tpu.dot_dimension_numbers<[1], [1], [0], [0], [0, 0, 1, 0], [], []>} : vector<8x64xf32>, vector<8x64xf32>, vector<8x8xf32> -> vector<8x8xf32>
    %26 = vector.extract_strided_slice %4 {offsets = [0, 448], sizes = [8, 64], strides = [1, 1]} : vector<8x1536xf32> to vector<8x64xf32>
    %27 = vector.extract_strided_slice %4 {offsets = [0, 960], sizes = [8, 64], strides = [1, 1]} : vector<8x1536xf32> to vector<8x64xf32>
    %cst_13 = arith.constant dense<0.000000e+00> : vector<8x8xf32>
    %28 = tpu.matmul %26, %27, %cst_13 {dimension_numbers = #tpu.dot_dimension_numbers<[1], [1], [0], [0], [0, 0, 1, 0], [], []>} : vector<8x64xf32>, vector<8x64xf32>, vector<8x8xf32> -> vector<8x8xf32>
    %29 = tpu.concatenate %7, %10, %13, %16, %19, %22, %25, %28 in 1 : vector<8x8xf32>, vector<8x8xf32>, vector<8x8xf32>, vector<8x8xf32>, vector<8x8xf32>, vector<8x8xf32>, vector<8x8xf32>, vector<8x8xf32> -> vector<8x64xf32>
    %cst_14 = arith.constant dense<0xFF800000> : vector<8xf32>
    %30 = vector.multi_reduction <maximumf>, %29, %cst_14 [1] : vector<8x64xf32> to vector<8xf32>
    %31 = vector.shape_cast %30 : vector<8xf32> to vector<8x1xf32>
    %32 = vector.broadcast %31 : vector<8x1xf32> to vector<8x64xf32>
    %33 = arith.subf %29, %32 : vector<8x64xf32>
    %34 = math.exp %33 : vector<8x64xf32>
    %35 = vector.extract_strided_slice %34 {offsets = [0, 0], sizes = [8, 8], strides = [1, 1]} : vector<8x64xf32> to vector<8x8xf32>
    %cst_15 = arith.constant dense<0.000000e+00> : vector<8xf32>
    %36 = vector.multi_reduction <add>, %35, %cst_15 [1] : vector<8x8xf32> to vector<8xf32>
    %37 = vector.shape_cast %36 : vector<8xf32> to vector<8x1xf32>
    %38 = tpu.reciprocal %37 {approx = true} : vector<8x1xf32> -> vector<8x1xf32>
    %39 = vector.extract_strided_slice %4 {offsets = [0, 1024], sizes = [8, 64], strides = [1, 1]} : vector<8x1536xf32> to vector<8x64xf32>
    %cst_16 = arith.constant dense<0.000000e+00> : vector<8x64xf32>
    %40 = tpu.matmul %35, %39, %cst_16 {dimension_numbers = #tpu.dot_dimension_numbers<[1], [0], [0], [1], [0, 0, 1, 1], [], []>} : vector<8x8xf32>, vector<8x64xf32>, vector<8x64xf32> -> vector<8x64xf32>
    %41 = vector.broadcast %38 : vector<8x1xf32> to vector<8x64xf32>
    %42 = arith.mulf %40, %41 : vector<8x64xf32>
    %43 = vector.extract_strided_slice %34 {offsets = [0, 8], sizes = [8, 8], strides = [1, 1]} : vector<8x64xf32> to vector<8x8xf32>
    %cst_17 = arith.constant dense<0.000000e+00> : vector<8xf32>
    %44 = vector.multi_reduction <add>, %43, %cst_17 [1] : vector<8x8xf32> to vector<8xf32>
    %45 = vector.shape_cast %44 : vector<8xf32> to vector<8x1xf32>
    %46 = tpu.reciprocal %45 {approx = true} : vector<8x1xf32> -> vector<8x1xf32>
    %47 = vector.extract_strided_slice %4 {offsets = [0, 1088], sizes = [8, 64], strides = [1, 1]} : vector<8x1536xf32> to vector<8x64xf32>
    %cst_18 = arith.constant dense<0.000000e+00> : vector<8x64xf32>
    %48 = tpu.matmul %43, %47, %cst_18 {dimension_numbers = #tpu.dot_dimension_numbers<[1], [0], [0], [1], [0, 0, 1, 1], [], []>} : vector<8x8xf32>, vector<8x64xf32>, vector<8x64xf32> -> vector<8x64xf32>
    %49 = vector.broadcast %46 : vector<8x1xf32> to vector<8x64xf32>
    %50 = arith.mulf %48, %49 : vector<8x64xf32>
    %51 = vector.extract_strided_slice %34 {offsets = [0, 16], sizes = [8, 8], strides = [1, 1]} : vector<8x64xf32> to vector<8x8xf32>
    %cst_19 = arith.constant dense<0.000000e+00> : vector<8xf32>
    %52 = vector.multi_reduction <add>, %51, %cst_19 [1] : vector<8x8xf32> to vector<8xf32>
    %53 = vector.shape_cast %52 : vector<8xf32> to vector<8x1xf32>
    %54 = tpu.reciprocal %53 {approx = true} : vector<8x1xf32> -> vector<8x1xf32>
    %55 = vector.extract_strided_slice %4 {offsets = [0, 1152], sizes = [8, 64], strides = [1, 1]} : vector<8x1536xf32> to vector<8x64xf32>
    %cst_20 = arith.constant dense<0.000000e+00> : vector<8x64xf32>
    %56 = tpu.matmul %51, %55, %cst_20 {dimension_numbers = #tpu.dot_dimension_numbers<[1], [0], [0], [1], [0, 0, 1, 1], [], []>} : vector<8x8xf32>, vector<8x64xf32>, vector<8x64xf32> -> vector<8x64xf32>
    %57 = vector.broadcast %54 : vector<8x1xf32> to vector<8x64xf32>
    %58 = arith.mulf %56, %57 : vector<8x64xf32>
    %59 = vector.extract_strided_slice %34 {offsets = [0, 24], sizes = [8, 8], strides = [1, 1]} : vector<8x64xf32> to vector<8x8xf32>
    %cst_21 = arith.constant dense<0.000000e+00> : vector<8xf32>
    %60 = vector.multi_reduction <add>, %59, %cst_21 [1] : vector<8x8xf32> to vector<8xf32>
    %61 = vector.shape_cast %60 : vector<8xf32> to vector<8x1xf32>
    %62 = tpu.reciprocal %61 {approx = true} : vector<8x1xf32> -> vector<8x1xf32>
    %63 = vector.extract_strided_slice %4 {offsets = [0, 1216], sizes = [8, 64], strides = [1, 1]} : vector<8x1536xf32> to vector<8x64xf32>
    %cst_22 = arith.constant dense<0.000000e+00> : vector<8x64xf32>
    %64 = tpu.matmul %59, %63, %cst_22 {dimension_numbers = #tpu.dot_dimension_numbers<[1], [0], [0], [1], [0, 0, 1, 1], [], []>} : vector<8x8xf32>, vector<8x64xf32>, vector<8x64xf32> -> vector<8x64xf32>
    %65 = vector.broadcast %62 : vector<8x1xf32> to vector<8x64xf32>
    %66 = arith.mulf %64, %65 : vector<8x64xf32>
    %67 = vector.extract_strided_slice %34 {offsets = [0, 32], sizes = [8, 8], strides = [1, 1]} : vector<8x64xf32> to vector<8x8xf32>
    %cst_23 = arith.constant dense<0.000000e+00> : vector<8xf32>
    %68 = vector.multi_reduction <add>, %67, %cst_23 [1] : vector<8x8xf32> to vector<8xf32>
    %69 = vector.shape_cast %68 : vector<8xf32> to vector<8x1xf32>
    %70 = tpu.reciprocal %69 {approx = true} : vector<8x1xf32> -> vector<8x1xf32>
    %71 = vector.extract_strided_slice %4 {offsets = [0, 1280], sizes = [8, 64], strides = [1, 1]} : vector<8x1536xf32> to vector<8x64xf32>
    %cst_24 = arith.constant dense<0.000000e+00> : vector<8x64xf32>
    %72 = tpu.matmul %67, %71, %cst_24 {dimension_numbers = #tpu.dot_dimension_numbers<[1], [0], [0], [1], [0, 0, 1, 1], [], []>} : vector<8x8xf32>, vector<8x64xf32>, vector<8x64xf32> -> vector<8x64xf32>
    %73 = vector.broadcast %70 : vector<8x1xf32> to vector<8x64xf32>
    %74 = arith.mulf %72, %73 : vector<8x64xf32>
    %75 = vector.extract_strided_slice %34 {offsets = [0, 40], sizes = [8, 8], strides = [1, 1]} : vector<8x64xf32> to vector<8x8xf32>
    %cst_25 = arith.constant dense<0.000000e+00> : vector<8xf32>
    %76 = vector.multi_reduction <add>, %75, %cst_25 [1] : vector<8x8xf32> to vector<8xf32>
    %77 = vector.shape_cast %76 : vector<8xf32> to vector<8x1xf32>
    %78 = tpu.reciprocal %77 {approx = true} : vector<8x1xf32> -> vector<8x1xf32>
    %79 = vector.extract_strided_slice %4 {offsets = [0, 1344], sizes = [8, 64], strides = [1, 1]} : vector<8x1536xf32> to vector<8x64xf32>
    %cst_26 = arith.constant dense<0.000000e+00> : vector<8x64xf32>
    %80 = tpu.matmul %75, %79, %cst_26 {dimension_numbers = #tpu.dot_dimension_numbers<[1], [0], [0], [1], [0, 0, 1, 1], [], []>} : vector<8x8xf32>, vector<8x64xf32>, vector<8x64xf32> -> vector<8x64xf32>
    %81 = vector.broadcast %78 : vector<8x1xf32> to vector<8x64xf32>
    %82 = arith.mulf %80, %81 : vector<8x64xf32>
    %83 = vector.extract_strided_slice %34 {offsets = [0, 48], sizes = [8, 8], strides = [1, 1]} : vector<8x64xf32> to vector<8x8xf32>
    %cst_27 = arith.constant dense<0.000000e+00> : vector<8xf32>
    %84 = vector.multi_reduction <add>, %83, %cst_27 [1] : vector<8x8xf32> to vector<8xf32>
    %85 = vector.shape_cast %84 : vector<8xf32> to vector<8x1xf32>
    %86 = tpu.reciprocal %85 {approx = true} : vector<8x1xf32> -> vector<8x1xf32>
    %87 = vector.extract_strided_slice %4 {offsets = [0, 1408], sizes = [8, 64], strides = [1, 1]} : vector<8x1536xf32> to vector<8x64xf32>
    %cst_28 = arith.constant dense<0.000000e+00> : vector<8x64xf32>
    %88 = tpu.matmul %83, %87, %cst_28 {dimension_numbers = #tpu.dot_dimension_numbers<[1], [0], [0], [1], [0, 0, 1, 1], [], []>} : vector<8x8xf32>, vector<8x64xf32>, vector<8x64xf32> -> vector<8x64xf32>
    %89 = vector.broadcast %86 : vector<8x1xf32> to vector<8x64xf32>
    %90 = arith.mulf %88, %89 : vector<8x64xf32>
    %91 = vector.extract_strided_slice %34 {offsets = [0, 56], sizes = [8, 8], strides = [1, 1]} : vector<8x64xf32> to vector<8x8xf32>
    %cst_29 = arith.constant dense<0.000000e+00> : vector<8xf32>
    %92 = vector.multi_reduction <add>, %91, %cst_29 [1] : vector<8x8xf32> to vector<8xf32>
    %93 = vector.shape_cast %92 : vector<8xf32> to vector<8x1xf32>
    %94 = tpu.reciprocal %93 {approx = true} : vector<8x1xf32> -> vector<8x1xf32>
    %95 = vector.extract_strided_slice %4 {offsets = [0, 1472], sizes = [8, 64], strides = [1, 1]} : vector<8x1536xf32> to vector<8x64xf32>
    %cst_30 = arith.constant dense<0.000000e+00> : vector<8x64xf32>
    %96 = tpu.matmul %91, %95, %cst_30 {dimension_numbers = #tpu.dot_dimension_numbers<[1], [0], [0], [1], [0, 0, 1, 1], [], []>} : vector<8x8xf32>, vector<8x64xf32>, vector<8x64xf32> -> vector<8x64xf32>
    %97 = vector.broadcast %94 : vector<8x1xf32> to vector<8x64xf32>
    %98 = arith.mulf %96, %97 : vector<8x64xf32>
    %99 = tpu.concatenate %42, %50, %58, %66, %74, %82, %90, %98 in 1 : vector<8x64xf32>, vector<8x64xf32>, vector<8x64xf32>, vector<8x64xf32>, vector<8x64xf32>, vector<8x64xf32>, vector<8x64xf32>, vector<8x64xf32> -> vector<8x512xf32>
    %cst_31 = arith.constant dense<0.000000e+00> : vector<8x128xf32>
    %100 = tpu.matmul %99, %3, %cst_31 {dimension_numbers = #tpu.dot_dimension_numbers<[1], [0], [0], [1], [0, 0, 1, 1], [], []>} : vector<8x512xf32>, vector<512x128xf32>, vector<8x128xf32> -> vector<8x128xf32>
    %c0_32 = arith.constant 0 : index
    %c0_33 = arith.constant 0 : index
    %c0_34 = arith.constant 0 : index
    %101 = vector.load %arg6[%c0_32, %c0_33, %c0_34] : memref<1x8x128xf32, #tpu.memory_space<vmem>>, vector<1x8x128xf32>
    %102 = vector.shape_cast %101 : vector<1x8x128xf32> to vector<8x128xf32>
    %103 = vector.shape_cast %100 : vector<8x128xf32> to vector<1x8x128xf32>
    tpu.vector_store %arg6[%c0_32, %c0_33, %c0_34], %103 {strides = array<i32>} : memref<1x8x128xf32, #tpu.memory_space<vmem>>, vector<1x8x128xf32>,
    %c0_35 = arith.constant 0 : index
    %c0_36 = arith.constant 0 : index
    %c0_37 = arith.constant 0 : index
    %104 = vector.load %arg4[%c0_35, %c0_36, %c0_37] : memref<1x8x128xf32, #tpu.memory_space<vmem>>, vector<1x8x128xf32>
    %105 = vector.shape_cast %104 : vector<1x8x128xf32> to vector<8x128xf32>
    %c0_38 = arith.constant 0 : index
    %c0_39 = arith.constant 0 : index
    %106 = vector.load %arg5[%c0_38, %c0_39] : memref<128x128xf32, #tpu.memory_space<vmem>>, vector<128x128xf32>
    %cst_40 = arith.constant dense<0.000000e+00> : vector<8x128xf32>
    %107 = tpu.matmul %105, %106, %cst_40 {dimension_numbers = #tpu.dot_dimension_numbers<[1], [0], [0], [1], [0, 0, 1, 1], [], []>} : vector<8x128xf32>, vector<128x128xf32>, vector<8x128xf32> -> vector<8x128xf32>
    %c0_41 = arith.constant 0 : index
    %c0_42 = arith.constant 0 : index
    %c0_43 = arith.constant 0 : index
    %108 = vector.load %arg7[%c0_41, %c0_42, %c0_43] : memref<1x8x128xf32, #tpu.memory_space<vmem>>, vector<1x8x128xf32>
    %109 = vector.shape_cast %108 : vector<1x8x128xf32> to vector<8x128xf32>
    %110 = vector.shape_cast %107 : vector<8x128xf32> to vector<1x8x128xf32>
    tpu.vector_store %arg7[%c0_41, %c0_42, %c0_43], %110 {strides = array<i32>} : memref<1x8x128xf32, #tpu.memory_space<vmem>>, vector<1x8x128xf32>,
    return
  }
  func.func @transform_0(%arg0: i32) -> (i32, i32, i32) {
    %c0_i32 = arith.constant 0 : i32
    %c0_i32_0 = arith.constant 0 : i32
    %c0_i32_1 = arith.constant 0 : i32
    return %arg0, %c0_i32, %c0_i32_0 : i32, i32, i32
  }
  func.func @transform_1(%arg0: i32) -> (i32, i32) {
    %c0_i32 = arith.constant 0 : i32
    %c0_i32_0 = arith.constant 0 : i32
    %c0_i32_1 = arith.constant 0 : i32
    return %c0_i32, %c0_i32_0 : i32, i32
  }
  func.func @transform_2(%arg0: i32) -> (i32, i32) {
    %c0_i32 = arith.constant 0 : i32
    %c0_i32_0 = arith.constant 0 : i32
    %c0_i32_1 = arith.constant 0 : i32
    return %c0_i32, %c0_i32_0 : i32, i32
  }
  func.func @transform_3(%arg0: i32) -> (i32, i32, i32) {
    %c0_i32 = arith.constant 0 : i32
    %c0_i32_0 = arith.constant 0 : i32
    %c0_i32_1 = arith.constant 0 : i32
    return %arg0, %c0_i32, %c0_i32_0 : i32, i32, i32
  }
  func.func @transform_4(%arg0: i32) -> (i32, i32) {
    %c0_i32 = arith.constant 0 : i32
    %c0_i32_0 = arith.constant 0 : i32
    %c0_i32_1 = arith.constant 0 : i32
    return %c0_i32, %c0_i32_0 : i32, i32
  }
  func.func @transform_5(%arg0: i32) -> (i32, i32, i32) {
    %c0_i32 = arith.constant 0 : i32
    %c0_i32_0 = arith.constant 0 : i32
    %c0_i32_1 = arith.constant 0 : i32
    return %arg0, %c0_i32, %c0_i32_0 : i32, i32, i32
  }
  func.func @transform_6(%arg0: i32) -> (i32, i32, i32) {
    %c0_i32 = arith.constant 0 : i32
    %c0_i32_0 = arith.constant 0 : i32
    %c0_i32_1 = arith.constant 0 : i32
    return %arg0, %c0_i32, %c0_i32_0 : i32, i32, i32
  }
}

</mosaic_0001>

<llo_original>
// kernel: tpu_custom_call.1
$region0: #{tpu_custom_call.1}
  #allocation0 [shape = 'u32[]', space=smem, size = 0x4, offset = 0x4, fixed_abs, tag = 'smem constant byte address 0x4 - core index']
  #allocation1 [shape = 'u32[144,128]{1,0:T(1,128)}', space=vmem, size = 0x12000, scoped, tag = 'internal scratch']
  %s0 = inlined_call_operand.hbm [shape: f32[2,8,128], index: 0, kind: input, shape index: {}]
  %s1 = inlined_call_operand.hbm [shape: f32[128,1536], index: 1, kind: input, shape index: {}]
  %s2 = inlined_call_operand.hbm [shape: f32[512,128], index: 2, kind: input, shape index: {}]
  %s3 = inlined_call_operand.hbm [shape: f32[2,8,128], index: 3, kind: input, shape index: {}]
  %s4 = inlined_call_operand.hbm [shape: f32[128,128], index: 4, kind: input, shape index: {}]
  %s5 = inlined_call_operand.hbm [shape: f32[2,8,128], index: 5, kind: output, shape index: {0}]
  %s6 = inlined_call_operand.hbm [shape: f32[2,8,128], index: 6, kind: output, shape index: {1}]
  %7 = xla_tuple %s5, %s6
  %s8 = sld [smem:[#allocation0]]
  $region81: #{tpu_custom_call.1} parent=0
    _
  %s10 = ssub.s32 1, %s8
  %s11 = scalar_select 0, %s10, %s8
  $region1: #{tpu_custom_call.1} parent=0
    #allocation2 [shape = 'u8[8192]{0}', space=vmem, size = 0x2000, scoped, tag = 'input window, operand 0']
    #allocation3 [shape = 's32[2]{0}', space=sflag, size = 0x8, scoped, tag = 'scoped memory for tpu_custom_call.1']
    #allocation4 [shape = 's32[2]{0}', space=sflag, size = 0x8, scoped, tag = 'scoped memory for tpu_custom_call.1']
    #allocation5 [shape = 'u8[786432]{0}', space=vmem, size = 0xc0000, scoped, tag = 'input window, operand 1, single buffered']
    #allocation6 [shape = 's32[1]{0}', space=sflag, size = 0x4, scoped, tag = 'scoped memory for tpu_custom_call.1']
    #allocation7 [shape = 'u8[262144]{0}', space=vmem, size = 0x40000, scoped, tag = 'input window, operand 2, single buffered']
    #allocation8 [shape = 'u8[8192]{0}', space=vmem, size = 0x2000, scoped, tag = 'input window, operand 3']
    #allocation9 [shape = 's32[2]{0}', space=sflag, size = 0x8, scoped, tag = 'scoped memory for tpu_custom_call.1']
    #allocation10 [shape = 'u8[65536]{0}', space=vmem, size = 0x10000, scoped, tag = 'input window, operand 4, single buffered']
    #allocation11 [shape = 'u8[8192]{0}', space=vmem, size = 0x2000, scoped, tag = 'output window, operand 0']
    #allocation12 [shape = 'u8[8192]{0}', space=vmem, size = 0x2000, scoped, tag = 'output window, operand 1']
    #allocation13 [shape = 's32[2]{0}', space=sflag, size = 0x8, scoped, tag = 'scoped memory for tpu_custom_call.1']
    %12 = vsyncpa [#allocation3], 0
    %s13 = scalar_lea.sflag [#allocation3], 1
    %14 = vsyncpa %s13, 0
    %15 = vsyncpa [#allocation6], 0
    %16 = vsyncpa [#allocation9], 0
    %s17 = scalar_lea.sflag [#allocation9], 1
    %18 = vsyncpa %s17, 0
    %19 = vsyncpa [#allocation4], 0
    %s20 = scalar_lea.sflag [#allocation4], 1
    %21 = vsyncpa %s20, 0
    %22 = vsyncpa [#allocation13], 0
    %s23 = scalar_lea.sflag [#allocation13], 1
    %24 = vsyncpa %s23, 0
    loop: start=0, step=1, limit=4
    $region2: #{tpu_custom_call.1} parent=1 // loop_pre_header
      _
    $region3: #{tpu_custom_call.1} parent=1 // loop_header
      %s26 = sphi 0, %s30
      %p27 = scmp.ge.s32.totalorder %s26, 4
      %s36 = sphi 0, %s38
      %s39 = sphi 0, %s36
      %s40 = sphi 0, %s39
      %s56 = sphi 0, %s40
      %s60 = sphi 0, %s60
      %s62 = sphi 0, %s60
      %s63 = sphi 0, %s62
      %s77 = sphi 0, %s63
      %s81 = sphi 0, %s81
      %s83 = sphi 0, %s81
      %s84 = sphi 0, %s83
      %s98 = sphi 0, %s84
      %s104 = sphi 0, %s106
      %s107 = sphi 0, %s104
      %s108 = sphi 0, %s107
      %s124 = sphi 0, %s108
      %s128 = sphi 0, %s128
      %s130 = sphi 0, %s128
      %s131 = sphi 0, %s130
      %s145 = sphi 0, %s131
      %s151 = sphi 0, %s153
      %s154 = sphi 0, %s151
      %s155 = sphi 0, %s154
      %s171 = sphi 0, %s155
      %s177 = sphi 0, %s179
      %s180 = sphi 0, %s177
      %s181 = sphi 0, %s180
      %s197 = sphi 0, %s181
    $region4: #{tpu_custom_call.1} parent=1 // loop_header_branch
      %29 = sbr.rel (%p27) target = $region8
    $region5: #{tpu_custom_call.1} parent=1 // loop_body
      %s31 = ssub.s32 %s26, 1
      %s32 = ssub.s32 %s26, 2
      %s33 = sadd.s32 %s26, 1
      %s34 = ssub.s32 %s26, %s33
      %p35 = scmp.eq.s32.totalorder %s34, 0
      %s37 = sadd.s32 %s36, 1
      %s38 = scalar_select %p35, %s36, %s37
      %p41 = pneg %p35
      %p42 = scmp.eq.s32.totalorder %s26, 1
      %p43 = por %p41, %p42
      %p44 = scmp.ne.s32.totalorder %s36, %s39
      %p45 = scmp.eq.s32.totalorder %s26, 0
      %p46 = por %p44, %p45
      %p47 = scmp.ne.s32.totalorder %s36, %s39
      %p48 = scmp.eq.s32.totalorder %s31, 1
      %p49 = por %p47, %p48
      %p50 = scmp.ne.s32.totalorder %s39, %s40
      %p51 = scmp.eq.s32.totalorder %s31, 0
      %p52 = por %p50, %p51
      %p53 = scmp.ne.s32.totalorder %s39, %s40
      %p54 = scmp.eq.s32.totalorder %s32, 1
      %p55 = por %p53, %p54
      %p57 = scmp.ne.s32.totalorder %s40, %s56
      %p58 = scmp.eq.s32.totalorder %s32, 0
      %p59 = por %p57, %p58
      %s61 = sadd.s32 %s60, 1
      %p64 = scmp.eq.s32.totalorder %s26, 1
      %p65 = scmp.ne.s32.totalorder %s60, %s62
      %p66 = scmp.eq.s32.totalorder %s26, 0
      %p67 = por %p65, %p66
      %p68 = scmp.ne.s32.totalorder %s60, %s62
      %p69 = scmp.eq.s32.totalorder %s31, 1
      %p70 = por %p68, %p69
      %p71 = scmp.ne.s32.totalorder %s62, %s63
      %p72 = scmp.eq.s32.totalorder %s31, 0
      %p73 = por %p71, %p72
      %p74 = scmp.ne.s32.totalorder %s62, %s63
      %p75 = scmp.eq.s32.totalorder %s32, 1
      %p76 = por %p74, %p75
      %p78 = scmp.ne.s32.totalorder %s63, %s77
      %p79 = scmp.eq.s32.totalorder %s32, 0
      %p80 = por %p78, %p79
      %s82 = sadd.s32 %s81, 1
      %p85 = scmp.eq.s32.totalorder %s26, 1
      %p86 = scmp.ne.s32.totalorder %s81, %s83
      %p87 = scmp.eq.s32.totalorder %s26, 0
      %p88 = por %p86, %p87
      %p89 = scmp.ne.s32.totalorder %s81, %s83
      %p90 = scmp.eq.s32.totalorder %s31, 1
      %p91 = por %p89, %p90
      %p92 = scmp.ne.s32.totalorder %s83, %s84
      %p93 = scmp.eq.s32.totalorder %s31, 0
      %p94 = por %p92, %p93
      %p95 = scmp.ne.s32.totalorder %s83, %s84
      %p96 = scmp.eq.s32.totalorder %s32, 1
      %p97 = por %p95, %p96
      %p99 = scmp.ne.s32.totalorder %s84, %s98
      %p100 = scmp.eq.s32.totalorder %s32, 0
      %p101 = por %p99, %p100
      %s102 = ssub.s32 %s26, %s33
      %p103 = scmp.eq.s32.totalorder %s102, 0
      %s105 = sadd.s32 %s104, 1
      %s106 = scalar_select %p103, %s104, %s105
      %p109 = pneg %p103
      %p110 = scmp.eq.s32.totalorder %s26, 1
      %p111 = por %p109, %p110
      %p112 = scmp.ne.s32.totalorder %s104, %s107
      %p113 = scmp.eq.s32.totalorder %s26, 0
      %p114 = por %p112, %p113
      %p115 = scmp.ne.s32.totalorder %s104, %s107
      %p116 = scmp.eq.s32.totalorder %s31, 1
      %p117 = por %p115, %p116
      %p118 = scmp.ne.s32.totalorder %s107, %s108
      %p119 = scmp.eq.s32.totalorder %s31, 0
      %p120 = por %p118, %p119
      %p121 = scmp.ne.s32.totalorder %s107, %s108
      %p122 = scmp.eq.s32.totalorder %s32, 1
      %p123 = por %p121, %p122
      %p125 = scmp.ne.s32.totalorder %s108, %s124
      %p126 = scmp.eq.s32.totalorder %s32, 0
      %p127 = por %p125, %p126
      %s129 = sadd.s32 %s128, 1
      %p132 = scmp.eq.s32.totalorder %s26, 1
      %p133 = scmp.ne.s32.totalorder %s128, %s130
      %p134 = scmp.eq.s32.totalorder %s26, 0
      %p135 = por %p133, %p134
      %p136 = scmp.ne.s32.totalorder %s128, %s130
      %p137 = scmp.eq.s32.totalorder %s31, 1
      %p138 = por %p136, %p137
      %p139 = scmp.ne.s32.totalorder %s130, %s131
      %p140 = scmp.eq.s32.totalorder %s31, 0
      %p141 = por %p139, %p140
      %p142 = scmp.ne.s32.totalorder %s130, %s131
      %p143 = scmp.eq.s32.totalorder %s32, 1
      %p144 = por %p142, %p143
      %p146 = scmp.ne.s32.totalorder %s131, %s145
      %p147 = scmp.eq.s32.totalorder %s32, 0
      %p148 = por %p146, %p147
      %s149 = ssub.s32 %s26, %s33
      %p150 = scmp.eq.s32.totalorder %s149, 0
      %s152 = sadd.s32 %s151, 1
      %s153 = scalar_select %p150, %s151, %s152
      %p156 = pneg %p150
      %p157 = scmp.eq.s32.totalorder %s26, 1
      %p158 = por %p156, %p157
      %p159 = scmp.ne.s32.totalorder %s151, %s154
      %p160 = scmp.eq.s32.totalorder %s26, 0
      %p161 = por %p159, %p160
      %p162 = scmp.ne.s32.totalorder %s151, %s154
      %p163 = scmp.eq.s32.totalorder %s31, 1
      %p164 = por %p162, %p163
      %p165 = scmp.ne.s32.totalorder %s154, %s155
      %p166 = scmp.eq.s32.totalorder %s31, 0
      %p167 = por %p165, %p166
      %p168 = scmp.ne.s32.totalorder %s154, %s155
      %p169 = scmp.eq.s32.totalorder %s32, 1
      %p170 = por %p168, %p169
      %p172 = scmp.ne.s32.totalorder %s155, %s171
      %p173 = scmp.eq.s32.totalorder %s32, 0
      %p174 = por %p172, %p173
      %s175 = ssub.s32 %s26, %s33
      %p176 = scmp.eq.s32.totalorder %s175, 0
      %s178 = sadd.s32 %s177, 1
      %s179 = scalar_select %p176, %s177, %s178
      %p182 = pneg %p176
      %p183 = scmp.eq.s32.totalorder %s26, 1
      %p184 = por %p182, %p183
      %p185 = scmp.ne.s32.totalorder %s177, %s180
      %p186 = scmp.eq.s32.totalorder %s26, 0
      %p187 = por %p185, %p186
      %p188 = scmp.ne.s32.totalorder %s177, %s180
      %p189 = scmp.eq.s32.totalorder %s31, 1
      %p190 = por %p188, %p189
      %p191 = scmp.ne.s32.totalorder %s180, %s181
      %p192 = scmp.eq.s32.totalorder %s31, 0
      %p193 = por %p191, %p192
      %p194 = scmp.ne.s32.totalorder %s180, %s181
      %p195 = scmp.eq.s32.totalorder %s32, 1
      %p196 = por %p194, %p195
      %p198 = scmp.ne.s32.totalorder %s181, %s197
      %p199 = scmp.eq.s32.totalorder %s32, 0
      %p200 = por %p198, %p199
      %p201 = scmp.le.s32.totalorder 1, %s26
      %p202 = scmp.lt.s32.totalorder %s26, 3
      %p203 = pnand %p201, %p202
      %p204 = pneg %p203
      // Predicated region
      $region9: #{tpu_custom_call.1} parent=5 // pred_check
        _
      $region10: #{tpu_custom_call.1} parent=5 // pred_check_branch
        %206 = sbr.rel (%p203) target = $region12
      $region11: #{tpu_custom_call.1} parent=5 // pred_region
        %s207 = ssub.s32 %s26, 1
        // Predicated region
        $region13: #{tpu_custom_call.1} parent=11 // pred_check
          %p208 = pneg %p73
        $region14: #{tpu_custom_call.1} parent=11 // pred_check_branch
          %210 = sbr.rel (%p208) target = $region16
        $region15: #{tpu_custom_call.1} parent=11 // pred_region
          %s212 = ssub.s32 24576, 24576
          %213 = vsyncadd [#allocation6], %s212
          %s214 = sshll.u32 [#allocation5], 4
          %s215 = int_to_ptr.vmem [resolvable:$true] %s214
          %220 = dma.hbm_to_vmem [thread:$0]  %s1, 24576, %s215, [#allocation6], 1536, 1536, 96
        $region16: #{tpu_custom_call.1} parent=11 // pred_fallthru
          _
        // Predicated region
        $region17: #{tpu_custom_call.1} parent=11 // pred_check
          %p221 = pneg %p94
        $region18: #{tpu_custom_call.1} parent=11 // pred_check_branch
          %223 = sbr.rel (%p221) target = $region20
        $region19: #{tpu_custom_call.1} parent=11 // pred_region
          %s225 = ssub.s32 8192, 8192
          %226 = vsyncadd [#allocation6], %s225
          %s227 = sshll.u32 [#allocation7], 4
          %s228 = int_to_ptr.vmem [resolvable:$true] %s227
          %233 = dma.hbm_to_vmem [thread:$0]  %s2, 8192, %s228, [#allocation6], 128, 128, 8
        $region20: #{tpu_custom_call.1} parent=11 // pred_fallthru
          _
        // Predicated region
        $region21: #{tpu_custom_call.1} parent=11 // pred_check
          %p234 = pneg %p141
        $region22: #{tpu_custom_call.1} parent=11 // pred_check_branch
          %236 = sbr.rel (%p234) target = $region24
        $region23: #{tpu_custom_call.1} parent=11 // pred_region
          %s238 = ssub.s32 2048, 2048
          %239 = vsyncadd [#allocation9], %s238
          %s240 = sshll.u32 [#allocation10], 4
          %s241 = int_to_ptr.vmem [resolvable:$true] %s240
          %246 = dma.hbm_to_vmem [thread:$0]  %s4, 2048, %s241, [#allocation9], 128, 128, 8
        $region24: #{tpu_custom_call.1} parent=11 // pred_fallthru
          _
      $region12: #{tpu_custom_call.1} parent=5 // pred_fallthru
        _
      %p247 = scmp.lt.s32.totalorder %s26, 2
      // Predicated region
      $region25: #{tpu_custom_call.1} parent=5 // pred_check
        %p248 = pneg %p247
      $region26: #{tpu_custom_call.1} parent=5 // pred_check_branch
        %250 = sbr.rel (%p248) target = $region28
      $region27: #{tpu_custom_call.1} parent=5 // pred_region
        // Predicated region
        $region29: #{tpu_custom_call.1} parent=27 // pred_check
          %p251 = pneg %p46
        $region30: #{tpu_custom_call.1} parent=27 // pred_check_branch
          %253 = sbr.rel (%p251) target = $region32
        $region31: #{tpu_custom_call.1} parent=27 // pred_region
          %s254 = sand.u32 %s36, 1
          %s255 = scalar_lea.sflag [#allocation3], %s254
          %s256 = sand.u32 %s36, 1
          %s257 = smul.addr %s256, 8
          %s258 = scalar_lea.vmem [#allocation2], %s257
          %s260 = ssub.s32 128, 128
          %261 = vsyncadd %s255, %s260
          %s262 = smul.addr %s26, 128
          %s263 = scalar_lea.hbm %s0, %s262
          %s265 = sshll.u32 %s258, 4
          %s266 = int_to_ptr.vmem [resolvable:$true] %s265
          %268 = dma.hbm_to_vmem [thread:$0]  %s263, 128, %s266, %s255
        $region32: #{tpu_custom_call.1} parent=27 // pred_fallthru
          _
        // Predicated region
        $region33: #{tpu_custom_call.1} parent=27 // pred_check
          %p269 = pneg %p114
        $region34: #{tpu_custom_call.1} parent=27 // pred_check_branch
          %271 = sbr.rel (%p269) target = $region36
        $region35: #{tpu_custom_call.1} parent=27 // pred_region
          %s272 = sand.u32 %s26, 1
          %s273 = scalar_lea.sflag [#allocation9], %s272
          %s274 = sand.u32 %s104, 1
          %s275 = smul.addr %s274, 8
          %s276 = scalar_lea.vmem [#allocation8], %s275
          %s278 = ssub.s32 128, 128
          %279 = vsyncadd %s273, %s278
          %s280 = smul.addr %s26, 128
          %s281 = scalar_lea.hbm %s3, %s280
          %s283 = sshll.u32 %s276, 4
          %s284 = int_to_ptr.vmem [resolvable:$true] %s283
          %286 = dma.hbm_to_vmem [thread:$0]  %s281, 128, %s284, %s273
        $region36: #{tpu_custom_call.1} parent=27 // pred_fallthru
          _
      $region28: #{tpu_custom_call.1} parent=5 // pred_fallthru
        _
      %p287 = scmp.le.s32.totalorder 1, %s26
      %p288 = scmp.lt.s32.totalorder %s26, 3
      %p289 = pnand %p287, %p288
      %p290 = pneg %p289
      // Predicated region
      $region37: #{tpu_custom_call.1} parent=5 // pred_check
        _
      $region38: #{tpu_custom_call.1} parent=5 // pred_check_branch
        %292 = sbr.rel (%p289) target = $region40
      $region39: #{tpu_custom_call.1} parent=5 // pred_region
        %s293 = ssub.s32 %s26, 1
        %s294 = sand.u32 %s39, 1
        %s295 = scalar_lea.sflag [#allocation3], %s294
        %s296 = sand.u32 %s39, 1
        %s297 = smul.addr %s296, 8
        %s298 = scalar_lea.vmem [#allocation2], %s297
        // Predicated region
        $region41: #{tpu_custom_call.1} parent=39 // pred_check
          %p299 = pneg %p52
        $region42: #{tpu_custom_call.1} parent=39 // pred_check_branch
          %301 = sbr.rel (%p299) target = $region44
        $region43: #{tpu_custom_call.1} parent=39 // pred_region
          %302 = dma.done %s295, 128
        $region44: #{tpu_custom_call.1} parent=39 // pred_fallthru
          _
        // Predicated region
        $region45: #{tpu_custom_call.1} parent=39 // pred_check
          %p303 = pneg %p73
        $region46: #{tpu_custom_call.1} parent=39 // pred_check_branch
          %305 = sbr.rel (%p303) target = $region48
        $region47: #{tpu_custom_call.1} parent=39 // pred_region
          %306 = dma.done [#allocation6], 24576
        $region48: #{tpu_custom_call.1} parent=39 // pred_fallthru
          _
        // Predicated region
        $region49: #{tpu_custom_call.1} parent=39 // pred_check
          %p307 = pneg %p94
        $region50: #{tpu_custom_call.1} parent=39 // pred_check_branch
          %309 = sbr.rel (%p307) target = $region52
        $region51: #{tpu_custom_call.1} parent=39 // pred_region
          %310 = dma.done [#allocation6], 8192
        $region52: #{tpu_custom_call.1} parent=39 // pred_fallthru
          _
        %s311 = sand.u32 %s31, 1
        %s312 = scalar_lea.sflag [#allocation9], %s311
        %s313 = sand.u32 %s107, 1
        %s314 = smul.addr %s313, 8
        %s315 = scalar_lea.vmem [#allocation8], %s314
        // Predicated region
        $region53: #{tpu_custom_call.1} parent=39 // pred_check
          %p316 = pneg %p120
        $region54: #{tpu_custom_call.1} parent=39 // pred_check_branch
          %318 = sbr.rel (%p316) target = $region56
        $region55: #{tpu_custom_call.1} parent=39 // pred_region
          %319 = dma.done %s312, 128
        $region56: #{tpu_custom_call.1} parent=39 // pred_fallthru
          _
        // Predicated region
        $region57: #{tpu_custom_call.1} parent=39 // pred_check
          %p320 = pneg %p141
        $region58: #{tpu_custom_call.1} parent=39 // pred_check_branch
          %322 = sbr.rel (%p320) target = $region60
        $region59: #{tpu_custom_call.1} parent=39 // pred_region
          %323 = dma.done [#allocation9], 2048
        $region60: #{tpu_custom_call.1} parent=39 // pred_fallthru
          _
        %s324 = sand.u32 %s39, 1
        %s325 = scalar_lea.sflag [#allocation3], %s324
        %s326 = sand.u32 %s39, 1
        %s327 = smul.addr %s326, 8
        %s328 = scalar_lea.vmem [#allocation2], %s327
        %p329 = pneg %p52
        %p330 = pneg %p49
        %p331 = pneg %p73
        %p332 = pneg %p70
        %p333 = pneg %p94
        %p334 = pneg %p91
        %s335 = sand.u32 %s31, 1
        %s336 = scalar_lea.sflag [#allocation9], %s335
        %s337 = sand.u32 %s107, 1
        %s338 = smul.addr %s337, 8
        %s339 = scalar_lea.vmem [#allocation8], %s338
        %p340 = pneg %p120
        %p341 = pneg %p117
        %p342 = pneg %p141
        %p343 = pneg %p138
        %p344 = pneg %p167
        %p345 = pneg %p164
        %s346 = sand.u32 %s154, 1
        %s347 = scalar_lea.sflag [#allocation4], %s346
        %s348 = sand.u32 %s154, 1
        %s349 = smul.addr %s348, 8
        %s350 = scalar_lea.vmem [#allocation11], %s349
        %p351 = pneg %p193
        %p352 = pneg %p190
        %s353 = sand.u32 %s180, 1
        %s354 = scalar_lea.sflag [#allocation13], %s353
        %s355 = sand.u32 %s180, 1
        %s356 = smul.addr %s355, 8
        %s357 = scalar_lea.vmem [#allocation12], %s356
        %v358 = vld [vmem:[%s298] sm:$0xff]
        %v359 = vld [vmem:[#allocation5] sm:$0xff]
        %v360 = vld [vmem:[#allocation5 + $0x8] sm:$0xff]
        %v361 = vld [vmem:[#allocation5 + $0x10] sm:$0xff]
        %v362 = vld [vmem:[#allocation5 + $0x18] sm:$0xff]
        %v363 = vld [vmem:[#allocation5 + $0x20] sm:$0xff]
        %v364 = vld [vmem:[#allocation5 + $0x28] sm:$0xff]
        %v365 = vld [vmem:[#allocation5 + $0x30] sm:$0xff]
        %v366 = vld [vmem:[#allocation5 + $0x38] sm:$0xff]
        %v367 = vld [vmem:[#allocation5 + $0x40] sm:$0xff]
        %v368 = vld [vmem:[#allocation5 + $0x48] sm:$0xff]
        %v369 = vld [vmem:[#allocation5 + $0x50] sm:$0xff]
        %v370 = vld [vmem:[#allocation5 + $0x58] sm:$0xff]
        %v371 = vld [vmem:[#allocation5 + $0x60] sm:$0xff]
        %v372 = vld [vmem:[#allocation5 + $0x68] sm:$0xff]
        %v373 = vld [vmem:[#allocation5 + $0x70] sm:$0xff]
        %v374 = vld [vmem:[#allocation5 + $0x78] sm:$0xff]
        %v375 = vld [vmem:[#allocation5 + $0x80] sm:$0xff]
        %v376 = vld [vmem:[#allocation5 + $0x88] sm:$0xff]
        %v377 = vld [vmem:[#allocation5 + $0x90] sm:$0xff]
        %v378 = vld [vmem:[#allocation5 + $0x98] sm:$0xff]
        %v379 = vld [vmem:[#allocation5 + $0xa0] sm:$0xff]
        %v380 = vld [vmem:[#allocation5 + $0xa8] sm:$0xff]
        %v381 = vld [vmem:[#allocation5 + $0xb0] sm:$0xff]
        %v382 = vld [vmem:[#allocation5 + $0xb8] sm:$0xff]
        %v383 = vld [vmem:[#allocation5 + $0xc0] sm:$0xff]
        %v384 = vld [vmem:[#allocation5 + $0xc8] sm:$0xff]
        %v385 = vld [vmem:[#allocation5 + $0xd0] sm:$0xff]
        %v386 = vld [vmem:[#allocation5 + $0xd8] sm:$0xff]
        %v387 = vld [vmem:[#allocation5 + $0xe0] sm:$0xff]
        %v388 = vld [vmem:[#allocation5 + $0xe8] sm:$0xff]
        %v389 = vld [vmem:[#allocation5 + $0xf0] sm:$0xff]
        %v390 = vld [vmem:[#allocation5 + $0xf8] sm:$0xff]
        %v391 = vld [vmem:[#allocation5 + $0x100] sm:$0xff]
        %v392 = vld [vmem:[#allocation5 + $0x108] sm:$0xff]
        %v393 = vld [vmem:[#allocation5 + $0x110] sm:$0xff]
        %v394 = vld [vmem:[#allocation5 + $0x118] sm:$0xff]
        %v395 = vld [vmem:[#allocation5 + $0x120] sm:$0xff]
        %v396 = vld [vmem:[#allocation5 + $0x128] sm:$0xff]
        %v397 = vld [vmem:[#allocation5 + $0x130] sm:$0xff]
        %v398 = vld [vmem:[#allocation5 + $0x138] sm:$0xff]
        %v399 = vld [vmem:[#allocation5 + $0x140] sm:$0xff]
        %v400 = vld [vmem:[#allocation5 + $0x148] sm:$0xff]
        %v401 = vld [vmem:[#allocation5 + $0x150] sm:$0xff]
        %v402 = vld [vmem:[#allocation5 + $0x158] sm:$0xff]
        %v403 = vld [vmem:[#allocation5 + $0x160] sm:$0xff]
        %v404 = vld [vmem:[#allocation5 + $0x168] sm:$0xff]
        %v405 = vld [vmem:[#allocation5 + $0x170] sm:$0xff]
        %v406 = vld [vmem:[#allocation5 + $0x178] sm:$0xff]
        %v407 = vld [vmem:[#allocation5 + $0x180] sm:$0xff]
        %v408 = vld [vmem:[#allocation5 + $0x188] sm:$0xff]
        %v409 = vld [vmem:[#allocation5 + $0x190] sm:$0xff]
        %v410 = vld [vmem:[#allocation5 + $0x198] sm:$0xff]
        %v411 = vld [vmem:[#allocation5 + $0x1a0] sm:$0xff]
        %v412 = vld [vmem:[#allocation5 + $0x1a8] sm:$0xff]
        %v413 = vld [vmem:[#allocation5 + $0x1b0] sm:$0xff]
        %v414 = vld [vmem:[#allocation5 + $0x1b8] sm:$0xff]
        %v415 = vld [vmem:[#allocation5 + $0x1c0] sm:$0xff]
        %v416 = vld [vmem:[#allocation5 + $0x1c8] sm:$0xff]
        %v417 = vld [vmem:[#allocation5 + $0x1d0] sm:$0xff]
        %v418 = vld [vmem:[#allocation5 + $0x1d8] sm:$0xff]
        %v419 = vld [vmem:[#allocation5 + $0x1e0] sm:$0xff]
        %v420 = vld [vmem:[#allocation5 + $0x1e8] sm:$0xff]
        %v421 = vld [vmem:[#allocation5 + $0x1f0] sm:$0xff]
        %v422 = vld [vmem:[#allocation5 + $0x1f8] sm:$0xff]
        %v423 = vld [vmem:[#allocation5 + $0x200] sm:$0xff]
        %v424 = vld [vmem:[#allocation5 + $0x208] sm:$0xff]
        %v425 = vld [vmem:[#allocation5 + $0x210] sm:$0xff]
        %v426 = vld [vmem:[#allocation5 + $0x218] sm:$0xff]
        %v427 = vld [vmem:[#allocation5 + $0x220] sm:$0xff]
        %v428 = vld [vmem:[#allocation5 + $0x228] sm:$0xff]
        %v429 = vld [vmem:[#allocation5 + $0x230] sm:$0xff]
        %v430 = vld [vmem:[#allocation5 + $0x238] sm:$0xff]
        %v431 = vld [vmem:[#allocation5 + $0x240] sm:$0xff]
        %v432 = vld [vmem:[#allocation5 + $0x248] sm:$0xff]
        %v433 = vld [vmem:[#allocation5 + $0x250] sm:$0xff]
        %v434 = vld [vmem:[#allocation5 + $0x258] sm:$0xff]
        %v435 = vld [vmem:[#allocation5 + $0x260] sm:$0xff]
        %v436 = vld [vmem:[#allocation5 + $0x268] sm:$0xff]
        %v437 = vld [vmem:[#allocation5 + $0x270] sm:$0xff]
        %v438 = vld [vmem:[#allocation5 + $0x278] sm:$0xff]
        %v439 = vld [vmem:[#allocation5 + $0x280] sm:$0xff]
        %v440 = vld [vmem:[#allocation5 + $0x288] sm:$0xff]
        %v441 = vld [vmem:[#allocation5 + $0x290] sm:$0xff]
        %v442 = vld [vmem:[#allocation5 + $0x298] sm:$0xff]
        %v443 = vld [vmem:[#allocation5 + $0x2a0] sm:$0xff]
        %v444 = vld [vmem:[#allocation5 + $0x2a8] sm:$0xff]
        %v445 = vld [vmem:[#allocation5 + $0x2b0] sm:$0xff]
        %v446 = vld [vmem:[#allocation5 + $0x2b8] sm:$0xff]
        %v447 = vld [vmem:[#allocation5 + $0x2c0] sm:$0xff]
        %v448 = vld [vmem:[#allocation5 + $0x2c8] sm:$0xff]
        %v449 = vld [vmem:[#allocation5 + $0x2d0] sm:$0xff]
        %v450 = vld [vmem:[#allocation5 + $0x2d8] sm:$0xff]
        %v451 = vld [vmem:[#allocation5 + $0x2e0] sm:$0xff]
        %v452 = vld [vmem:[#allocation5 + $0x2e8] sm:$0xff]
        %v453 = vld [vmem:[#allocation5 + $0x2f0] sm:$0xff]
        %v454 = vld [vmem:[#allocation5 + $0x2f8] sm:$0xff]
        %v455 = vld [vmem:[#allocation5 + $0x300] sm:$0xff]
        %v456 = vld [vmem:[#allocation5 + $0x308] sm:$0xff]
        %v457 = vld [vmem:[#allocation5 + $0x310] sm:$0xff]
        %v458 = vld [vmem:[#allocation5 + $0x318] sm:$0xff]
        %v459 = vld [vmem:[#allocation5 + $0x320] sm:$0xff]
        %v460 = vld [vmem:[#allocation5 + $0x328] sm:$0xff]
        %v461 = vld [vmem:[#allocation5 + $0x330] sm:$0xff]
        %v462 = vld [vmem:[#allocation5 + $0x338] sm:$0xff]
        %v463 = vld [vmem:[#allocation5 + $0x340] sm:$0xff]
        %v464 = vld [vmem:[#allocation5 + $0x348] sm:$0xff]
        %v465 = vld [vmem:[#allocation5 + $0x350] sm:$0xff]
        %v466 = vld [vmem:[#allocation5 + $0x358] sm:$0xff]
        %v467 = vld [vmem:[#allocation5 + $0x360] sm:$0xff]
        %v468 = vld [vmem:[#allocation5 + $0x368] sm:$0xff]
        %v469 = vld [vmem:[#allocation5 + $0x370] sm:$0xff]
        %v470 = vld [vmem:[#allocation5 + $0x378] sm:$0xff]
        %v471 = vld [vmem:[#allocation5 + $0x380] sm:$0xff]
        %v472 = vld [vmem:[#allocation5 + $0x388] sm:$0xff]
        %v473 = vld [vmem:[#allocation5 + $0x390] sm:$0xff]
        %v474 = vld [vmem:[#allocation5 + $0x398] sm:$0xff]
        %v475 = vld [vmem:[#allocation5 + $0x3a0] sm:$0xff]
        %v476 = vld [vmem:[#allocation5 + $0x3a8] sm:$0xff]
        %v477 = vld [vmem:[#allocation5 + $0x3b0] sm:$0xff]
        %v478 = vld [vmem:[#allocation5 + $0x3b8] sm:$0xff]
        %v479 = vld [vmem:[#allocation5 + $0x3c0] sm:$0xff]
        %v480 = vld [vmem:[#allocation5 + $0x3c8] sm:$0xff]
        %v481 = vld [vmem:[#allocation5 + $0x3d0] sm:$0xff]
        %v482 = vld [vmem:[#allocation5 + $0x3d8] sm:$0xff]
        %v483 = vld [vmem:[#allocation5 + $0x3e0] sm:$0xff]
        %v484 = vld [vmem:[#allocation5 + $0x3e8] sm:$0xff]
        %v485 = vld [vmem:[#allocation5 + $0x3f0] sm:$0xff]
        %v486 = vld [vmem:[#allocation5 + $0x3f8] sm:$0xff]
        %v487 = vld [vmem:[#allocation5 + $0x400] sm:$0xff]
        %v488 = vld [vmem:[#allocation5 + $0x408] sm:$0xff]
        %v489 = vld [vmem:[#allocation5 + $0x410] sm:$0xff]
        %v490 = vld [vmem:[#allocation5 + $0x418] sm:$0xff]
        %v491 = vld [vmem:[#allocation5 + $0x420] sm:$0xff]
        %v492 = vld [vmem:[#allocation5 + $0x428] sm:$0xff]
        %v493 = vld [vmem:[#allocation5 + $0x430] sm:$0xff]
        %v494 = vld [vmem:[#allocation5 + $0x438] sm:$0xff]
        %v495 = vld [vmem:[#allocation5 + $0x440] sm:$0xff]
        %v496 = vld [vmem:[#allocation5 + $0x448] sm:$0xff]
        %v497 = vld [vmem:[#allocation5 + $0x450] sm:$0xff]
        %v498 = vld [vmem:[#allocation5 + $0x458] sm:$0xff]
        %v499 = vld [vmem:[#allocation5 + $0x460] sm:$0xff]
        %v500 = vld [vmem:[#allocation5 + $0x468] sm:$0xff]
        %v501 = vld [vmem:[#allocation5 + $0x470] sm:$0xff]
        %v502 = vld [vmem:[#allocation5 + $0x478] sm:$0xff]
        %v503 = vld [vmem:[#allocation5 + $0x480] sm:$0xff]
        %v504 = vld [vmem:[#allocation5 + $0x488] sm:$0xff]
        %v505 = vld [vmem:[#allocation5 + $0x490] sm:$0xff]
        %v506 = vld [vmem:[#allocation5 + $0x498] sm:$0xff]
        %v507 = vld [vmem:[#allocation5 + $0x4a0] sm:$0xff]
        %v508 = vld [vmem:[#allocation5 + $0x4a8] sm:$0xff]
        %v509 = vld [vmem:[#allocation5 + $0x4b0] sm:$0xff]
        %v510 = vld [vmem:[#allocation5 + $0x4b8] sm:$0xff]
        %v511 = vld [vmem:[#allocation5 + $0x4c0] sm:$0xff]
        %v512 = vld [vmem:[#allocation5 + $0x4c8] sm:$0xff]
        %v513 = vld [vmem:[#allocation5 + $0x4d0] sm:$0xff]
        %v514 = vld [vmem:[#allocation5 + $0x4d8] sm:$0xff]
        %v515 = vld [vmem:[#allocation5 + $0x4e0] sm:$0xff]
        %v516 = vld [vmem:[#allocation5 + $0x4e8] sm:$0xff]
        %v517 = vld [vmem:[#allocation5 + $0x4f0] sm:$0xff]
        %v518 = vld [vmem:[#allocation5 + $0x4f8] sm:$0xff]
        %v519 = vld [vmem:[#allocation5 + $0x500] sm:$0xff]
        %v520 = vld [vmem:[#allocation5 + $0x508] sm:$0xff]
        %v521 = vld [vmem:[#allocation5 + $0x510] sm:$0xff]
        %v522 = vld [vmem:[#allocation5 + $0x518] sm:$0xff]
        %v523 = vld [vmem:[#allocation5 + $0x520] sm:$0xff]
        %v524 = vld [vmem:[#allocation5 + $0x528] sm:$0xff]
        %v525 = vld [vmem:[#allocation5 + $0x530] sm:$0xff]
        %v526 = vld [vmem:[#allocation5 + $0x538] sm:$0xff]
        %v527 = vld [vmem:[#allocation5 + $0x540] sm:$0xff]
        %v528 = vld [vmem:[#allocation5 + $0x548] sm:$0xff]
        %v529 = vld [vmem:[#allocation5 + $0x550] sm:$0xff]
        %v530 = vld [vmem:[#allocation5 + $0x558] sm:$0xff]
        %v531 = vld [vmem:[#allocation5 + $0x560] sm:$0xff]
        %v532 = vld [vmem:[#allocation5 + $0x568] sm:$0xff]
        %v533 = vld [vmem:[#allocation5 + $0x570] sm:$0xff]
        %v534 = vld [vmem:[#allocation5 + $0x578] sm:$0xff]
        %v535 = vld [vmem:[#allocation5 + $0x580] sm:$0xff]
        %v536 = vld [vmem:[#allocation5 + $0x588] sm:$0xff]
        %v537 = vld [vmem:[#allocation5 + $0x590] sm:$0xff]
        %v538 = vld [vmem:[#allocation5 + $0x598] sm:$0xff]
        %v539 = vld [vmem:[#allocation5 + $0x5a0] sm:$0xff]
        %v540 = vld [vmem:[#allocation5 + $0x5a8] sm:$0xff]
        %v541 = vld [vmem:[#allocation5 + $0x5b0] sm:$0xff]
        %v542 = vld [vmem:[#allocation5 + $0x5b8] sm:$0xff]
        %v543 = vld [vmem:[#allocation5 + $0x5c0] sm:$0xff]
        %v544 = vld [vmem:[#allocation5 + $0x5c8] sm:$0xff]
        %v545 = vld [vmem:[#allocation5 + $0x5d0] sm:$0xff]
        %v546 = vld [vmem:[#allocation5 + $0x5d8] sm:$0xff]
        %v547 = vld [vmem:[#allocation5 + $0x5e0] sm:$0xff]
        %v548 = vld [vmem:[#allocation5 + $0x5e8] sm:$0xff]
        %v549 = vld [vmem:[#allocation5 + $0x5f0] sm:$0xff]
        %v550 = vld [vmem:[#allocation5 + $0x5f8] sm:$0xff]
        %v551 = vld [vmem:[#allocation7] sm:$0xff]
        %v552 = vld [vmem:[#allocation7 + $0x8] sm:$0xff]
        %v553 = vld [vmem:[#allocation7 + $0x10] sm:$0xff]
        %v554 = vld [vmem:[#allocation7 + $0x18] sm:$0xff]
        %v555 = vld [vmem:[#allocation7 + $0x20] sm:$0xff]
        %v556 = vld [vmem:[#allocation7 + $0x28] sm:$0xff]
        %v557 = vld [vmem:[#allocation7 + $0x30] sm:$0xff]
        %v558 = vld [vmem:[#allocation7 + $0x38] sm:$0xff]
        %v559 = vld [vmem:[#allocation7 + $0x40] sm:$0xff]
        %v560 = vld [vmem:[#allocation7 + $0x48] sm:$0xff]
        %v561 = vld [vmem:[#allocation7 + $0x50] sm:$0xff]
        %v562 = vld [vmem:[#allocation7 + $0x58] sm:$0xff]
        %v563 = vld [vmem:[#allocation7 + $0x60] sm:$0xff]
        %v564 = vld [vmem:[#allocation7 + $0x68] sm:$0xff]
        %v565 = vld [vmem:[#allocation7 + $0x70] sm:$0xff]
        %v566 = vld [vmem:[#allocation7 + $0x78] sm:$0xff]
        %v567 = vld [vmem:[#allocation7 + $0x80] sm:$0xff]
        %v568 = vld [vmem:[#allocation7 + $0x88] sm:$0xff]
        %v569 = vld [vmem:[#allocation7 + $0x90] sm:$0xff]
        %v570 = vld [vmem:[#allocation7 + $0x98] sm:$0xff]
        %v571 = vld [vmem:[#allocation7 + $0xa0] sm:$0xff]
        %v572 = vld [vmem:[#allocation7 + $0xa8] sm:$0xff]
        %v573 = vld [vmem:[#allocation7 + $0xb0] sm:$0xff]
        %v574 = vld [vmem:[#allocation7 + $0xb8] sm:$0xff]
        %v575 = vld [vmem:[#allocation7 + $0xc0] sm:$0xff]
        %v576 = vld [vmem:[#allocation7 + $0xc8] sm:$0xff]
        %v577 = vld [vmem:[#allocation7 + $0xd0] sm:$0xff]
        %v578 = vld [vmem:[#allocation7 + $0xd8] sm:$0xff]
        %v579 = vld [vmem:[#allocation7 + $0xe0] sm:$0xff]
        %v580 = vld [vmem:[#allocation7 + $0xe8] sm:$0xff]
        %v581 = vld [vmem:[#allocation7 + $0xf0] sm:$0xff]
        %v582 = vld [vmem:[#allocation7 + $0xf8] sm:$0xff]
        %v583 = vld [vmem:[#allocation7 + $0x100] sm:$0xff]
        %v584 = vld [vmem:[#allocation7 + $0x108] sm:$0xff]
        %v585 = vld [vmem:[#allocation7 + $0x110] sm:$0xff]
        %v586 = vld [vmem:[#allocation7 + $0x118] sm:$0xff]
        %v587 = vld [vmem:[#allocation7 + $0x120] sm:$0xff]
        %v588 = vld [vmem:[#allocation7 + $0x128] sm:$0xff]
        %v589 = vld [vmem:[#allocation7 + $0x130] sm:$0xff]
        %v590 = vld [vmem:[#allocation7 + $0x138] sm:$0xff]
        %v591 = vld [vmem:[#allocation7 + $0x140] sm:$0xff]
        %v592 = vld [vmem:[#allocation7 + $0x148] sm:$0xff]
        %v593 = vld [vmem:[#allocation7 + $0x150] sm:$0xff]
        %v594 = vld [vmem:[#allocation7 + $0x158] sm:$0xff]
        %v595 = vld [vmem:[#allocation7 + $0x160] sm:$0xff]
        %v596 = vld [vmem:[#allocation7 + $0x168] sm:$0xff]
        %v597 = vld [vmem:[#allocation7 + $0x170] sm:$0xff]
        %v598 = vld [vmem:[#allocation7 + $0x178] sm:$0xff]
        %v599 = vld [vmem:[#allocation7 + $0x180] sm:$0xff]
        %v600 = vld [vmem:[#allocation7 + $0x188] sm:$0xff]
        %v601 = vld [vmem:[#allocation7 + $0x190] sm:$0xff]
        %v602 = vld [vmem:[#allocation7 + $0x198] sm:$0xff]
        %v603 = vld [vmem:[#allocation7 + $0x1a0] sm:$0xff]
        %v604 = vld [vmem:[#allocation7 + $0x1a8] sm:$0xff]
        %v605 = vld [vmem:[#allocation7 + $0x1b0] sm:$0xff]
        %v606 = vld [vmem:[#allocation7 + $0x1b8] sm:$0xff]
        %v607 = vld [vmem:[#allocation7 + $0x1c0] sm:$0xff]
        %v608 = vld [vmem:[#allocation7 + $0x1c8] sm:$0xff]
        %v609 = vld [vmem:[#allocation7 + $0x1d0] sm:$0xff]
        %v610 = vld [vmem:[#allocation7 + $0x1d8] sm:$0xff]
        %v611 = vld [vmem:[#allocation7 + $0x1e0] sm:$0xff]
        %v612 = vld [vmem:[#allocation7 + $0x1e8] sm:$0xff]
        %v613 = vld [vmem:[#allocation7 + $0x1f0] sm:$0xff]
        %v614 = vld [vmem:[#allocation7 + $0x1f8] sm:$0xff]
        %615 = vmatprep.subr.mxu0 %v360
        %616 = vmatpush1.msra.mxu0 %v359
        %617 = vmatprep.subr.mxu0 %v372
        %618 = vmatpush1.msra.mxu0 %v371
        %619 = vmatprep.subr.mxu0 %v384
        %620 = vmatpush1.msra.mxu0 %v383
        %621 = vmatprep.subr.mxu0 %v396
        %622 = vmatpush1.msra.mxu0 %v395
        %623 = vmatprep.subr.mxu0 %v408
        %624 = vmatpush1.msra.mxu0 %v407
        %625 = vmatprep.subr.mxu0 %v420
        %626 = vmatpush1.msra.mxu0 %v419
        %627 = vmatprep.subr.mxu0 %v432
        %628 = vmatpush1.msra.mxu0 %v431
        %629 = vmatprep.subr.mxu0 %v444
        %630 = vmatpush1.msra.mxu0 %v443
        %631 = vmatprep.subr.mxu0 %v456
        %632 = vmatpush1.msra.mxu0 %v455
        %633 = vmatprep.subr.mxu0 %v468
        %634 = vmatpush1.msra.mxu0 %v467
        %635 = vmatprep.subr.mxu0 %v480
        %636 = vmatpush1.msra.mxu0 %v479
        %637 = vmatprep.subr.mxu0 %v492
        %638 = vmatpush1.msra.mxu0 %v491
        %639 = vmatprep.subr.mxu0 %v504
        %640 = vmatpush1.msra.mxu0 %v503
        %641 = vmatprep.subr.mxu0 %v516
        %642 = vmatpush1.msra.mxu0 %v515
        %643 = vmatprep.subr.mxu0 %v528
        %644 = vmatpush1.msra.mxu0 %v527
        %645 = vmatprep.subr.mxu0 %v540
        %646 = vmatpush1.msra.mxu0 %v539
        %647 = vmatprep.subr.mxu0 0.0
        %648 = vmatpush1.msra.mxu0 0.0
        %649 = vmatprep.subr.mxu0 0.0
        %650 = vmatpush1.msra.mxu0 0.0
        %651 = vmatprep.subr.mxu0 0.0
        %652 = vmatpush1.msra.mxu0 0.0
        %653 = vmatprep.subr.mxu0 0.0
        %654 = vmatpush1.msra.mxu0 0.0
        %655 = vmatprep.subr.mxu0 0.0
        %656 = vmatpush1.msra.mxu0 0.0
        %657 = vmatprep.subr.mxu0 0.0
        %658 = vmatpush1.msra.mxu0 0.0
        %659 = vmatprep.subr.mxu0 0.0
        %660 = vmatpush1.msra.mxu0 0.0
        %661 = vmatprep.subr.mxu0 0.0
        %662 = vmatpush1.msra.mxu0 0.0
        %663 = vmatprep.subr.mxu0 0.0
        %664 = vmatpush1.msra.mxu0 0.0
        %665 = vmatprep.subr.mxu0 0.0
        %666 = vmatpush1.msra.mxu0 0.0
        %667 = vmatprep.subr.mxu0 0.0
        %668 = vmatpush1.msra.mxu0 0.0
        %669 = vmatprep.subr.mxu0 0.0
        %670 = vmatpush1.msra.mxu0 0.0
        %671 = vmatprep.subr.mxu0 0.0
        %672 = vmatpush1.msra.mxu0 0.0
        %673 = vmatprep.subr.mxu0 0.0
        %674 = vmatpush1.msra.mxu0 0.0
        %675 = vmatprep.subr.mxu0 0.0
        %676 = vmatpush1.msra.mxu0 0.0
        %677 = vmatprep.subr.mxu0 0.0
        %678 = vmatpush1.msra.mxu0 0.0
        %679 = vmatprep.mubr.f32.mxu0 0.0
        %680 = vmatmul.mubr.f32.gmra.mrb[0].mxu0 %v358
        %v681 = vpop.f32.mrb[0].mxu0
        %v682 = vadd.f32 0.0, %v681
        %v683 = vpop.f32.mrb[0].mxu0
        %v684 = vadd.f32 0.0, %v683
        %685 = vdwg.mxu0
        %686 = vmatprep.subr.mxu0 %v362
        %687 = vmatpush1.msra.mxu0 %v361
        %688 = vmatprep.subr.mxu0 %v374
        %689 = vmatpush1.msra.mxu0 %v373
        %690 = vmatprep.subr.mxu0 %v386
        %691 = vmatpush1.msra.mxu0 %v385
        %692 = vmatprep.subr.mxu0 %v398
        %693 = vmatpush1.msra.mxu0 %v397
        %694 = vmatprep.subr.mxu0 %v410
        %695 = vmatpush1.msra.mxu0 %v409
        %696 = vmatprep.subr.mxu0 %v422
        %697 = vmatpush1.msra.mxu0 %v421
        %698 = vmatprep.subr.mxu0 %v434
        %699 = vmatpush1.msra.mxu0 %v433
        %700 = vmatprep.subr.mxu0 %v446
        %701 = vmatpush1.msra.mxu0 %v445
        %702 = vmatprep.subr.mxu0 %v458
        %703 = vmatpush1.msra.mxu0 %v457
        %704 = vmatprep.subr.mxu0 %v470
        %705 = vmatpush1.msra.mxu0 %v469
        %706 = vmatprep.subr.mxu0 %v482
        %707 = vmatpush1.msra.mxu0 %v481
        %708 = vmatprep.subr.mxu0 %v494
        %709 = vmatpush1.msra.mxu0 %v493
        %710 = vmatprep.subr.mxu0 %v506
        %711 = vmatpush1.msra.mxu0 %v505
        %712 = vmatprep.subr.mxu0 %v518
        %713 = vmatpush1.msra.mxu0 %v517
        %714 = vmatprep.subr.mxu0 %v530
        %715 = vmatpush1.msra.mxu0 %v529
        %716 = vmatprep.subr.mxu0 %v542
        %717 = vmatpush1.msra.mxu0 %v541
        %718 = vmatprep.subr.mxu0 0.0
        %719 = vmatpush1.msra.mxu0 0.0
        %720 = vmatprep.subr.mxu0 0.0
        %721 = vmatpush1.msra.mxu0 0.0
        %722 = vmatprep.subr.mxu0 0.0
        %723 = vmatpush1.msra.mxu0 0.0
        %724 = vmatprep.subr.mxu0 0.0
        %725 = vmatpush1.msra.mxu0 0.0
        %726 = vmatprep.subr.mxu0 0.0
        %727 = vmatpush1.msra.mxu0 0.0
        %728 = vmatprep.subr.mxu0 0.0
        %729 = vmatpush1.msra.mxu0 0.0
        %730 = vmatprep.subr.mxu0 0.0
        %731 = vmatpush1.msra.mxu0 0.0
        %732 = vmatprep.subr.mxu0 0.0
        %733 = vmatpush1.msra.mxu0 0.0
        %734 = vmatprep.subr.mxu0 0.0
        %735 = vmatpush1.msra.mxu0 0.0
        %736 = vmatprep.subr.mxu0 0.0
        %737 = vmatpush1.msra.mxu0 0.0
        %738 = vmatprep.subr.mxu0 0.0
        %739 = vmatpush1.msra.mxu0 0.0
        %740 = vmatprep.subr.mxu0 0.0
        %741 = vmatpush1.msra.mxu0 0.0
        %742 = vmatprep.subr.mxu0 0.0
        %743 = vmatpush1.msra.mxu0 0.0
        %744 = vmatprep.subr.mxu0 0.0
        %745 = vmatpush1.msra.mxu0 0.0
        %746 = vmatprep.subr.mxu0 0.0
        %747 = vmatpush1.msra.mxu0 0.0
        %748 = vmatprep.subr.mxu0 0.0
        %749 = vmatpush1.msra.mxu0 0.0
        %750 = vmatprep.mubr.f32.mxu0 0.0
        %751 = vmatmul.mubr.f32.gmra.mrb[0].mxu0 %v358
        %v752 = vpop.f32.mrb[0].mxu0
        %v753 = vadd.f32 0.0, %v752
        %v754 = vpop.f32.mrb[0].mxu0
        %v755 = vadd.f32 0.0, %v754
        %756 = vdwg.mxu0
        %757 = vmatprep.subr.mxu0 %v364
        %758 = vmatpush1.msra.mxu0 %v363
        %759 = vmatprep.subr.mxu0 %v376
        %760 = vmatpush1.msra.mxu0 %v375
        %761 = vmatprep.subr.mxu0 %v388
        %762 = vmatpush1.msra.mxu0 %v387
        %763 = vmatprep.subr.mxu0 %v400
        %764 = vmatpush1.msra.mxu0 %v399
        %765 = vmatprep.subr.mxu0 %v412
        %766 = vmatpush1.msra.mxu0 %v411
        %767 = vmatprep.subr.mxu0 %v424
        %768 = vmatpush1.msra.mxu0 %v423
        %769 = vmatprep.subr.mxu0 %v436
        %770 = vmatpush1.msra.mxu0 %v435
        %771 = vmatprep.subr.mxu0 %v448
        %772 = vmatpush1.msra.mxu0 %v447
        %773 = vmatprep.subr.mxu0 %v460
        %774 = vmatpush1.msra.mxu0 %v459
        %775 = vmatprep.subr.mxu0 %v472
        %776 = vmatpush1.msra.mxu0 %v471
        %777 = vmatprep.subr.mxu0 %v484
        %778 = vmatpush1.msra.mxu0 %v483
        %779 = vmatprep.subr.mxu0 %v496
        %780 = vmatpush1.msra.mxu0 %v495
        %781 = vmatprep.subr.mxu0 %v508
        %782 = vmatpush1.msra.mxu0 %v507
        %783 = vmatprep.subr.mxu0 %v520
        %784 = vmatpush1.msra.mxu0 %v519
        %785 = vmatprep.subr.mxu0 %v532
        %786 = vmatpush1.msra.mxu0 %v531
        %787 = vmatprep.subr.mxu0 %v544
        %788 = vmatpush1.msra.mxu0 %v543
        %789 = vmatprep.subr.mxu0 0.0
        %790 = vmatpush1.msra.mxu0 0.0
        %791 = vmatprep.subr.mxu0 0.0
        %792 = vmatpush1.msra.mxu0 0.0
        %793 = vmatprep.subr.mxu0 0.0
        %794 = vmatpush1.msra.mxu0 0.0
        %795 = vmatprep.subr.mxu0 0.0
        %796 = vmatpush1.msra.mxu0 0.0
        %797 = vmatprep.subr.mxu0 0.0
        %798 = vmatpush1.msra.mxu0 0.0
        %799 = vmatprep.subr.mxu0 0.0
        %800 = vmatpush1.msra.mxu0 0.0
        %801 = vmatprep.subr.mxu0 0.0
        %802 = vmatpush1.msra.mxu0 0.0
        %803 = vmatprep.subr.mxu0 0.0
        %804 = vmatpush1.msra.mxu0 0.0
        %805 = vmatprep.subr.mxu0 0.0
        %806 = vmatpush1.msra.mxu0 0.0
        %807 = vmatprep.subr.mxu0 0.0
        %808 = vmatpush1.msra.mxu0 0.0
        %809 = vmatprep.subr.mxu0 0.0
        %810 = vmatpush1.msra.mxu0 0.0
        %811 = vmatprep.subr.mxu0 0.0
        %812 = vmatpush1.msra.mxu0 0.0
        %813 = vmatprep.subr.mxu0 0.0
        %814 = vmatpush1.msra.mxu0 0.0
        %815 = vmatprep.subr.mxu0 0.0
        %816 = vmatpush1.msra.mxu0 0.0
        %817 = vmatprep.subr.mxu0 0.0
        %818 = vmatpush1.msra.mxu0 0.0
        %819 = vmatprep.subr.mxu0 0.0
        %820 = vmatpush1.msra.mxu0 0.0
        %821 = vmatprep.mubr.f32.mxu0 0.0
        %822 = vmatmul.mubr.f32.gmra.mrb[0].mxu0 %v358
        %v823 = vpop.f32.mrb[0].mxu0
        %v824 = vadd.f32 0.0, %v823
        %v825 = vpop.f32.mrb[0].mxu0
        %v826 = vadd.f32 0.0, %v825
        %827 = vdwg.mxu0
        %828 = vmatprep.subr.mxu0 %v366
        %829 = vmatpush1.msra.mxu0 %v365
        %830 = vmatprep.subr.mxu0 %v378
        %831 = vmatpush1.msra.mxu0 %v377
        %832 = vmatprep.subr.mxu0 %v390
        %833 = vmatpush1.msra.mxu0 %v389
        %834 = vmatprep.subr.mxu0 %v402
        %835 = vmatpush1.msra.mxu0 %v401
        %836 = vmatprep.subr.mxu0 %v414
        %837 = vmatpush1.msra.mxu0 %v413
        %838 = vmatprep.subr.mxu0 %v426
        %839 = vmatpush1.msra.mxu0 %v425
        %840 = vmatprep.subr.mxu0 %v438
        %841 = vmatpush1.msra.mxu0 %v437
        %842 = vmatprep.subr.mxu0 %v450
        %843 = vmatpush1.msra.mxu0 %v449
        %844 = vmatprep.subr.mxu0 %v462
        %845 = vmatpush1.msra.mxu0 %v461
        %846 = vmatprep.subr.mxu0 %v474
        %847 = vmatpush1.msra.mxu0 %v473
        %848 = vmatprep.subr.mxu0 %v486
        %849 = vmatpush1.msra.mxu0 %v485
        %850 = vmatprep.subr.mxu0 %v498
        %851 = vmatpush1.msra.mxu0 %v497
        %852 = vmatprep.subr.mxu0 %v510
        %853 = vmatpush1.msra.mxu0 %v509
        %854 = vmatprep.subr.mxu0 %v522
        %855 = vmatpush1.msra.mxu0 %v521
        %856 = vmatprep.subr.mxu0 %v534
        %857 = vmatpush1.msra.mxu0 %v533
        %858 = vmatprep.subr.mxu0 %v546
        %859 = vmatpush1.msra.mxu0 %v545
        %860 = vmatprep.subr.mxu0 0.0
        %861 = vmatpush1.msra.mxu0 0.0
        %862 = vmatprep.subr.mxu0 0.0
        %863 = vmatpush1.msra.mxu0 0.0
        %864 = vmatprep.subr.mxu0 0.0
        %865 = vmatpush1.msra.mxu0 0.0
        %866 = vmatprep.subr.mxu0 0.0
        %867 = vmatpush1.msra.mxu0 0.0
        %868 = vmatprep.subr.mxu0 0.0
        %869 = vmatpush1.msra.mxu0 0.0
        %870 = vmatprep.subr.mxu0 0.0
        %871 = vmatpush1.msra.mxu0 0.0
        %872 = vmatprep.subr.mxu0 0.0
        %873 = vmatpush1.msra.mxu0 0.0
        %874 = vmatprep.subr.mxu0 0.0
        %875 = vmatpush1.msra.mxu0 0.0
        %876 = vmatprep.subr.mxu0 0.0
        %877 = vmatpush1.msra.mxu0 0.0
        %878 = vmatprep.subr.mxu0 0.0
        %879 = vmatpush1.msra.mxu0 0.0
        %880 = vmatprep.subr.mxu0 0.0
        %881 = vmatpush1.msra.mxu0 0.0
        %882 = vmatprep.subr.mxu0 0.0
        %883 = vmatpush1.msra.mxu0 0.0
        %884 = vmatprep.subr.mxu0 0.0
        %885 = vmatpush1.msra.mxu0 0.0
        %886 = vmatprep.subr.mxu0 0.0
        %887 = vmatpush1.msra.mxu0 0.0
        %888 = vmatprep.subr.mxu0 0.0
        %889 = vmatpush1.msra.mxu0 0.0
        %890 = vmatprep.subr.mxu0 0.0
        %891 = vmatpush1.msra.mxu0 0.0
        %892 = vmatprep.mubr.f32.mxu0 0.0
        %893 = vmatmul.mubr.f32.gmra.mrb[0].mxu0 %v358
        %v894 = vpop.f32.mrb[0].mxu0
        %v895 = vadd.f32 0.0, %v894
        %v896 = vpop.f32.mrb[0].mxu0
        %v897 = vadd.f32 0.0, %v896
        %898 = vdwg.mxu0
        %899 = vmatprep.subr.mxu0 %v368
        %900 = vmatpush1.msra.mxu0 %v367
        %901 = vmatprep.subr.mxu0 %v380
        %902 = vmatpush1.msra.mxu0 %v379
        %903 = vmatprep.subr.mxu0 %v392
        %904 = vmatpush1.msra.mxu0 %v391
        %905 = vmatprep.subr.mxu0 %v404
        %906 = vmatpush1.msra.mxu0 %v403
        %907 = vmatprep.subr.mxu0 %v416
        %908 = vmatpush1.msra.mxu0 %v415
        %909 = vmatprep.subr.mxu0 %v428
        %910 = vmatpush1.msra.mxu0 %v427
        %911 = vmatprep.subr.mxu0 %v440
        %912 = vmatpush1.msra.mxu0 %v439
        %913 = vmatprep.subr.mxu0 %v452
        %914 = vmatpush1.msra.mxu0 %v451
        %915 = vmatprep.subr.mxu0 %v464
        %916 = vmatpush1.msra.mxu0 %v463
        %917 = vmatprep.subr.mxu0 %v476
        %918 = vmatpush1.msra.mxu0 %v475
        %919 = vmatprep.subr.mxu0 %v488
        %920 = vmatpush1.msra.mxu0 %v487
        %921 = vmatprep.subr.mxu0 %v500
        %922 = vmatpush1.msra.mxu0 %v499
        %923 = vmatprep.subr.mxu0 %v512
        %924 = vmatpush1.msra.mxu0 %v511
        %925 = vmatprep.subr.mxu0 %v524
        %926 = vmatpush1.msra.mxu0 %v523
        %927 = vmatprep.subr.mxu0 %v536
        %928 = vmatpush1.msra.mxu0 %v535
        %929 = vmatprep.subr.mxu0 %v548
        %930 = vmatpush1.msra.mxu0 %v547
        %931 = vmatprep.subr.mxu0 0.0
        %932 = vmatpush1.msra.mxu0 0.0
        %933 = vmatprep.subr.mxu0 0.0
        %934 = vmatpush1.msra.mxu0 0.0
        %935 = vmatprep.subr.mxu0 0.0
        %936 = vmatpush1.msra.mxu0 0.0
        %937 = vmatprep.subr.mxu0 0.0
        %938 = vmatpush1.msra.mxu0 0.0
        %939 = vmatprep.subr.mxu0 0.0
        %940 = vmatpush1.msra.mxu0 0.0
        %941 = vmatprep.subr.mxu0 0.0
        %942 = vmatpush1.msra.mxu0 0.0
        %943 = vmatprep.subr.mxu0 0.0
        %944 = vmatpush1.msra.mxu0 0.0
        %945 = vmatprep.subr.mxu0 0.0
        %946 = vmatpush1.msra.mxu0 0.0
        %947 = vmatprep.subr.mxu0 0.0
        %948 = vmatpush1.msra.mxu0 0.0
        %949 = vmatprep.subr.mxu0 0.0
        %950 = vmatpush1.msra.mxu0 0.0
        %951 = vmatprep.subr.mxu0 0.0
        %952 = vmatpush1.msra.mxu0 0.0
        %953 = vmatprep.subr.mxu0 0.0
        %954 = vmatpush1.msra.mxu0 0.0
        %955 = vmatprep.subr.mxu0 0.0
        %956 = vmatpush1.msra.mxu0 0.0
        %957 = vmatprep.subr.mxu0 0.0
        %958 = vmatpush1.msra.mxu0 0.0
        %959 = vmatprep.subr.mxu0 0.0
        %960 = vmatpush1.msra.mxu0 0.0
        %961 = vmatprep.subr.mxu0 0.0
        %962 = vmatpush1.msra.mxu0 0.0
        %963 = vmatprep.mubr.f32.mxu0 0.0
        %964 = vmatmul.mubr.f32.gmra.mrb[0].mxu0 %v358
        %v965 = vpop.f32.mrb[0].mxu0
        %v966 = vadd.f32 0.0, %v965
        %v967 = vpop.f32.mrb[0].mxu0
        %v968 = vadd.f32 0.0, %v967
        %969 = vdwg.mxu0
        %970 = vmatprep.subr.mxu0 %v370
        %971 = vmatpush1.msra.mxu0 %v369
        %972 = vmatprep.subr.mxu0 %v382
        %973 = vmatpush1.msra.mxu0 %v381
        %974 = vmatprep.subr.mxu0 %v394
        %975 = vmatpush1.msra.mxu0 %v393
        %976 = vmatprep.subr.mxu0 %v406
        %977 = vmatpush1.msra.mxu0 %v405
        %978 = vmatprep.subr.mxu0 %v418
        %979 = vmatpush1.msra.mxu0 %v417
        %980 = vmatprep.subr.mxu0 %v430
        %981 = vmatpush1.msra.mxu0 %v429
        %982 = vmatprep.subr.mxu0 %v442
        %983 = vmatpush1.msra.mxu0 %v441
        %984 = vmatprep.subr.mxu0 %v454
        %985 = vmatpush1.msra.mxu0 %v453
        %986 = vmatprep.subr.mxu0 %v466
        %987 = vmatpush1.msra.mxu0 %v465
        %988 = vmatprep.subr.mxu0 %v478
        %989 = vmatpush1.msra.mxu0 %v477
        %990 = vmatprep.subr.mxu0 %v490
        %991 = vmatpush1.msra.mxu0 %v489
        %992 = vmatprep.subr.mxu0 %v502
        %993 = vmatpush1.msra.mxu0 %v501
        %994 = vmatprep.subr.mxu0 %v514
        %995 = vmatpush1.msra.mxu0 %v513
        %996 = vmatprep.subr.mxu0 %v526
        %997 = vmatpush1.msra.mxu0 %v525
        %998 = vmatprep.subr.mxu0 %v538
        %999 = vmatpush1.msra.mxu0 %v537
        %1000 = vmatprep.subr.mxu0 %v550
        %1001 = vmatpush1.msra.mxu0 %v549
        %1002 = vmatprep.subr.mxu0 0.0
        %1003 = vmatpush1.msra.mxu0 0.0
        %1004 = vmatprep.subr.mxu0 0.0
        %1005 = vmatpush1.msra.mxu0 0.0
        %1006 = vmatprep.subr.mxu0 0.0
        %1007 = vmatpush1.msra.mxu0 0.0
        %1008 = vmatprep.subr.mxu0 0.0
        %1009 = vmatpush1.msra.mxu0 0.0
        %1010 = vmatprep.subr.mxu0 0.0
        %1011 = vmatpush1.msra.mxu0 0.0
        %1012 = vmatprep.subr.mxu0 0.0
        %1013 = vmatpush1.msra.mxu0 0.0
        %1014 = vmatprep.subr.mxu0 0.0
        %1015 = vmatpush1.msra.mxu0 0.0
        %1016 = vmatprep.subr.mxu0 0.0
        %1017 = vmatpush1.msra.mxu0 0.0
        %1018 = vmatprep.subr.mxu0 0.0
        %1019 = vmatpush1.msra.mxu0 0.0
        %1020 = vmatprep.subr.mxu0 0.0
        %1021 = vmatpush1.msra.mxu0 0.0
        %1022 = vmatprep.subr.mxu0 0.0
        %1023 = vmatpush1.msra.mxu0 0.0
        %1024 = vmatprep.subr.mxu0 0.0
        %1025 = vmatpush1.msra.mxu0 0.0
        %1026 = vmatprep.subr.mxu0 0.0
        %1027 = vmatpush1.msra.mxu0 0.0
        %1028 = vmatprep.subr.mxu0 0.0
        %1029 = vmatpush1.msra.mxu0 0.0
        %1030 = vmatprep.subr.mxu0 0.0
        %1031 = vmatpush1.msra.mxu0 0.0
        %1032 = vmatprep.subr.mxu0 0.0
        %1033 = vmatpush1.msra.mxu0 0.0
        %1034 = vmatprep.mubr.f32.mxu0 0.0
        %1035 = vmatmul.mubr.f32.gmra.mrb[0].mxu0 %v358
        %v1036 = vpop.f32.mrb[0].mxu0
        %v1037 = vadd.f32 0.0, %v1036
        %v1038 = vpop.f32.mrb[0].mxu0
        %v1039 = vadd.f32 0.0, %v1038
        %1040 = vdwg.mxu0
        %vm1041 = vcmask 523264
        %v1043 = vsel %vm1041, %v682, 0
        %v1046 = vsel %vm1041, %v824, 0
        %1048 = vmatprep.subr.mxu0 0.0
        %1049 = vmatpush1.xpose.msra.mxu0 %v1046
        %1050 = vmatprep.subr.mxu0 0.0
        %1051 = vmatpush1.xpose.msra.mxu0 0.0
        %1052 = vmatprep.subr.mxu0 0.0
        %1053 = vmatpush1.xpose.msra.mxu0 0.0
        %1054 = vmatprep.subr.mxu0 0.0
        %1055 = vmatpush1.xpose.msra.mxu0 0.0
        %1056 = vmatprep.subr.mxu0 0.0
        %1057 = vmatpush1.xpose.msra.mxu0 0.0
        %1058 = vmatprep.subr.mxu0 0.0
        %1059 = vmatpush1.xpose.msra.mxu0 0.0
        %1060 = vmatprep.subr.mxu0 0.0
        %1061 = vmatpush1.xpose.msra.mxu0 0.0
        %1062 = vmatprep.subr.mxu0 0.0
        %1063 = vmatpush1.xpose.msra.mxu0 0.0
        %1064 = vmatprep.subr.mxu0 0.0
        %1065 = vmatpush1.xpose.msra.mxu0 0.0
        %1066 = vmatprep.subr.mxu0 0.0
        %1067 = vmatpush1.xpose.msra.mxu0 0.0
        %1068 = vmatprep.subr.mxu0 0.0
        %1069 = vmatpush1.xpose.msra.mxu0 0.0
        %1070 = vmatprep.subr.mxu0 0.0
        %1071 = vmatpush1.xpose.msra.mxu0 0.0
        %1072 = vmatprep.subr.mxu0 0.0
        %1073 = vmatpush1.xpose.msra.mxu0 0.0
        %1074 = vmatprep.subr.mxu0 0.0
        %1075 = vmatpush1.xpose.msra.mxu0 0.0
        %1076 = vmatprep.subr.mxu0 0.0
        %1077 = vmatpush1.xpose.msra.mxu0 0.0
        %1078 = vmatprep.subr.mxu0 0.0
        %1079 = vmatpush1.xpose.msra.mxu0 0.0
        %1080 = vmatprep.subr.mxu0 0.0
        %1081 = vmatpush1.xpose.msra.mxu0 0.0
        %1082 = vmatprep.subr.mxu0 0.0
        %1083 = vmatpush1.xpose.msra.mxu0 0.0
        %1084 = vmatprep.subr.mxu0 0.0
        %1085 = vmatpush1.xpose.msra.mxu0 0.0
        %1086 = vmatprep.subr.mxu0 0.0
        %1087 = vmatpush1.xpose.msra.mxu0 0.0
        %1088 = vmatprep.subr.mxu0 0.0
        %1089 = vmatpush1.xpose.msra.mxu0 0.0
        %1090 = vmatprep.subr.mxu0 0.0
        %1091 = vmatpush1.xpose.msra.mxu0 0.0
        %1092 = vmatprep.subr.mxu0 0.0
        %1093 = vmatpush1.xpose.msra.mxu0 0.0
        %1094 = vmatprep.subr.mxu0 0.0
        %1095 = vmatpush1.xpose.msra.mxu0 0.0
        %1096 = vmatprep.subr.mxu0 0.0
        %1097 = vmatpush1.xpose.msra.mxu0 0.0
        %1098 = vmatprep.subr.mxu0 0.0
        %1099 = vmatpush1.xpose.msra.mxu0 0.0
        %1100 = vmatprep.subr.mxu0 0.0
        %1101 = vmatpush1.xpose.msra.mxu0 0.0
        %1102 = vmatprep.subr.mxu0 0.0
        %1103 = vmatpush1.xpose.msra.mxu0 0.0
        %1104 = vmatprep.subr.mxu0 0.0
        %1105 = vmatpush1.xpose.msra.mxu0 0.0
        %1106 = vmatprep.subr.mxu0 0.0
        %1107 = vmatpush1.xpose.msra.mxu0 0.0
        %1108 = vmatprep.subr.mxu0 0.0
        %1109 = vmatpush1.xpose.msra.mxu0 0.0
        %1110 = vmatprep.subr.mxu0 0.0
        %1111 = vmatpush1.xpose.msra.mxu0 0.0
        %1112 = vmatprep.mubr.f32.mxu0 0.0
        %1113 = vmatmul.mubr.f32.gmra.mrb[0].mxu0 %v1043
        %v1114 = vpop.f32.mrb[0].mxu0
        %v1115 = vadd.f32 0.0, %v1114
        %v1116 = vpop.f32.mrb[0].mxu0
        %1117 = vdwg.mxu0
        %1118 = vrot.lane.b32.xlu0 %v682, 64
        %v1119 = vpop.permute.xlu0 %1118
        %1120 = vrot.lane.b32.xlu0 %v824, 64
        %v1121 = vpop.permute.xlu0 %1120
        %v1122 = vsel %vm1041, %v1119, 0
        %v1124 = vsel %vm1041, %v1121, 0
        %1126 = vmatprep.subr.mxu0 0.0
        %1127 = vmatpush1.xpose.msra.mxu0 %v1124
        %1128 = vmatprep.subr.mxu0 0.0
        %1129 = vmatpush1.xpose.msra.mxu0 0.0
        %1130 = vmatprep.subr.mxu0 0.0
        %1131 = vmatpush1.xpose.msra.mxu0 0.0
        %1132 = vmatprep.subr.mxu0 0.0
        %1133 = vmatpush1.xpose.msra.mxu0 0.0
        %1134 = vmatprep.subr.mxu0 0.0
        %1135 = vmatpush1.xpose.msra.mxu0 0.0
        %1136 = vmatprep.subr.mxu0 0.0
        %1137 = vmatpush1.xpose.msra.mxu0 0.0
        %1138 = vmatprep.subr.mxu0 0.0
        %1139 = vmatpush1.xpose.msra.mxu0 0.0
        %1140 = vmatprep.subr.mxu0 0.0
        %1141 = vmatpush1.xpose.msra.mxu0 0.0
        %1142 = vmatprep.subr.mxu0 0.0
        %1143 = vmatpush1.xpose.msra.mxu0 0.0
        %1144 = vmatprep.subr.mxu0 0.0
        %1145 = vmatpush1.xpose.msra.mxu0 0.0
        %1146 = vmatprep.subr.mxu0 0.0
        %1147 = vmatpush1.xpose.msra.mxu0 0.0
        %1148 = vmatprep.subr.mxu0 0.0
        %1149 = vmatpush1.xpose.msra.mxu0 0.0
        %1150 = vmatprep.subr.mxu0 0.0
        %1151 = vmatpush1.xpose.msra.mxu0 0.0
        %1152 = vmatprep.subr.mxu0 0.0
        %1153 = vmatpush1.xpose.msra.mxu0 0.0
        %1154 = vmatprep.subr.mxu0 0.0
        %1155 = vmatpush1.xpose.msra.mxu0 0.0
        %1156 = vmatprep.subr.mxu0 0.0
        %1157 = vmatpush1.xpose.msra.mxu0 0.0
        %1158 = vmatprep.subr.mxu0 0.0
        %1159 = vmatpush1.xpose.msra.mxu0 0.0
        %1160 = vmatprep.subr.mxu0 0.0
        %1161 = vmatpush1.xpose.msra.mxu0 0.0
        %1162 = vmatprep.subr.mxu0 0.0
        %1163 = vmatpush1.xpose.msra.mxu0 0.0
        %1164 = vmatprep.subr.mxu0 0.0
        %1165 = vmatpush1.xpose.msra.mxu0 0.0
        %1166 = vmatprep.subr.mxu0 0.0
        %1167 = vmatpush1.xpose.msra.mxu0 0.0
        %1168 = vmatprep.subr.mxu0 0.0
        %1169 = vmatpush1.xpose.msra.mxu0 0.0
        %1170 = vmatprep.subr.mxu0 0.0
        %1171 = vmatpush1.xpose.msra.mxu0 0.0
        %1172 = vmatprep.subr.mxu0 0.0
        %1173 = vmatpush1.xpose.msra.mxu0 0.0
        %1174 = vmatprep.subr.mxu0 0.0
        %1175 = vmatpush1.xpose.msra.mxu0 0.0
        %1176 = vmatprep.subr.mxu0 0.0
        %1177 = vmatpush1.xpose.msra.mxu0 0.0
        %1178 = vmatprep.subr.mxu0 0.0
        %1179 = vmatpush1.xpose.msra.mxu0 0.0
        %1180 = vmatprep.subr.mxu0 0.0
        %1181 = vmatpush1.xpose.msra.mxu0 0.0
        %1182 = vmatprep.subr.mxu0 0.0
        %1183 = vmatpush1.xpose.msra.mxu0 0.0
        %1184 = vmatprep.subr.mxu0 0.0
        %1185 = vmatpush1.xpose.msra.mxu0 0.0
        %1186 = vmatprep.subr.mxu0 0.0
        %1187 = vmatpush1.xpose.msra.mxu0 0.0
        %1188 = vmatprep.subr.mxu0 0.0
        %1189 = vmatpush1.xpose.msra.mxu0 0.0
        %1190 = vmatprep.mubr.f32.mxu0 0.0
        %1191 = vmatmul.mubr.f32.gmra.mrb[0].mxu0 %v1122
        %v1192 = vpop.f32.mrb[0].mxu0
        %v1193 = vadd.f32 0.0, %v1192
        %v1194 = vpop.f32.mrb[0].mxu0
        %1195 = vdwg.mxu0
        %v1197 = vsel %vm1041, %v684, 0
        %v1200 = vsel %vm1041, %v826, 0
        %1202 = vmatprep.subr.mxu0 0.0
        %1203 = vmatpush1.xpose.msra.mxu0 %v1200
        %1204 = vmatprep.subr.mxu0 0.0
        %1205 = vmatpush1.xpose.msra.mxu0 0.0
        %1206 = vmatprep.subr.mxu0 0.0
        %1207 = vmatpush1.xpose.msra.mxu0 0.0
        %1208 = vmatprep.subr.mxu0 0.0
        %1209 = vmatpush1.xpose.msra.mxu0 0.0
        %1210 = vmatprep.subr.mxu0 0.0
        %1211 = vmatpush1.xpose.msra.mxu0 0.0
        %1212 = vmatprep.subr.mxu0 0.0
        %1213 = vmatpush1.xpose.msra.mxu0 0.0
        %1214 = vmatprep.subr.mxu0 0.0
        %1215 = vmatpush1.xpose.msra.mxu0 0.0
        %1216 = vmatprep.subr.mxu0 0.0
        %1217 = vmatpush1.xpose.msra.mxu0 0.0
        %1218 = vmatprep.subr.mxu0 0.0
        %1219 = vmatpush1.xpose.msra.mxu0 0.0
        %1220 = vmatprep.subr.mxu0 0.0
        %1221 = vmatpush1.xpose.msra.mxu0 0.0
        %1222 = vmatprep.subr.mxu0 0.0
        %1223 = vmatpush1.xpose.msra.mxu0 0.0
        %1224 = vmatprep.subr.mxu0 0.0
        %1225 = vmatpush1.xpose.msra.mxu0 0.0
        %1226 = vmatprep.subr.mxu0 0.0
        %1227 = vmatpush1.xpose.msra.mxu0 0.0
        %1228 = vmatprep.subr.mxu0 0.0
        %1229 = vmatpush1.xpose.msra.mxu0 0.0
        %1230 = vmatprep.subr.mxu0 0.0
        %1231 = vmatpush1.xpose.msra.mxu0 0.0
        %1232 = vmatprep.subr.mxu0 0.0
        %1233 = vmatpush1.xpose.msra.mxu0 0.0
        %1234 = vmatprep.subr.mxu0 0.0
        %1235 = vmatpush1.xpose.msra.mxu0 0.0
        %1236 = vmatprep.subr.mxu0 0.0
        %1237 = vmatpush1.xpose.msra.mxu0 0.0
        %1238 = vmatprep.subr.mxu0 0.0
        %1239 = vmatpush1.xpose.msra.mxu0 0.0
        %1240 = vmatprep.subr.mxu0 0.0
        %1241 = vmatpush1.xpose.msra.mxu0 0.0
        %1242 = vmatprep.subr.mxu0 0.0
        %1243 = vmatpush1.xpose.msra.mxu0 0.0
        %1244 = vmatprep.subr.mxu0 0.0
        %1245 = vmatpush1.xpose.msra.mxu0 0.0
        %1246 = vmatprep.subr.mxu0 0.0
        %1247 = vmatpush1.xpose.msra.mxu0 0.0
        %1248 = vmatprep.subr.mxu0 0.0
        %1249 = vmatpush1.xpose.msra.mxu0 0.0
        %1250 = vmatprep.subr.mxu0 0.0
        %1251 = vmatpush1.xpose.msra.mxu0 0.0
        %1252 = vmatprep.subr.mxu0 0.0
        %1253 = vmatpush1.xpose.msra.mxu0 0.0
        %1254 = vmatprep.subr.mxu0 0.0
        %1255 = vmatpush1.xpose.msra.mxu0 0.0
        %1256 = vmatprep.subr.mxu0 0.0
        %1257 = vmatpush1.xpose.msra.mxu0 0.0
        %1258 = vmatprep.subr.mxu0 0.0
        %1259 = vmatpush1.xpose.msra.mxu0 0.0
        %1260 = vmatprep.subr.mxu0 0.0
        %1261 = vmatpush1.xpose.msra.mxu0 0.0
        %1262 = vmatprep.subr.mxu0 0.0
        %1263 = vmatpush1.xpose.msra.mxu0 0.0
        %1264 = vmatprep.subr.mxu0 0.0
        %1265 = vmatpush1.xpose.msra.mxu0 0.0
        %1266 = vmatprep.mubr.f32.mxu0 0.0
        %1267 = vmatmul.mubr.f32.gmra.mrb[0].mxu0 %v1197
        %v1268 = vpop.f32.mrb[0].mxu0
        %v1269 = vadd.f32 0.0, %v1268
        %v1270 = vpop.f32.mrb[0].mxu0
        %1271 = vdwg.mxu0
        %1272 = vrot.lane.b32.xlu0 %v684, 64
        %v1273 = vpop.permute.xlu0 %1272
        %1274 = vrot.lane.b32.xlu0 %v826, 64
        %v1275 = vpop.permute.xlu0 %1274
        %v1276 = vsel %vm1041, %v1273, 0
        %v1278 = vsel %vm1041, %v1275, 0
        %1280 = vmatprep.subr.mxu0 0.0
        %1281 = vmatpush1.xpose.msra.mxu0 %v1278
        %1282 = vmatprep.subr.mxu0 0.0
        %1283 = vmatpush1.xpose.msra.mxu0 0.0
        %1284 = vmatprep.subr.mxu0 0.0
        %1285 = vmatpush1.xpose.msra.mxu0 0.0
        %1286 = vmatprep.subr.mxu0 0.0
        %1287 = vmatpush1.xpose.msra.mxu0 0.0
        %1288 = vmatprep.subr.mxu0 0.0
        %1289 = vmatpush1.xpose.msra.mxu0 0.0
        %1290 = vmatprep.subr.mxu0 0.0
        %1291 = vmatpush1.xpose.msra.mxu0 0.0
        %1292 = vmatprep.subr.mxu0 0.0
        %1293 = vmatpush1.xpose.msra.mxu0 0.0
        %1294 = vmatprep.subr.mxu0 0.0
        %1295 = vmatpush1.xpose.msra.mxu0 0.0
        %1296 = vmatprep.subr.mxu0 0.0
        %1297 = vmatpush1.xpose.msra.mxu0 0.0
        %1298 = vmatprep.subr.mxu0 0.0
        %1299 = vmatpush1.xpose.msra.mxu0 0.0
        %1300 = vmatprep.subr.mxu0 0.0
        %1301 = vmatpush1.xpose.msra.mxu0 0.0
        %1302 = vmatprep.subr.mxu0 0.0
        %1303 = vmatpush1.xpose.msra.mxu0 0.0
        %1304 = vmatprep.subr.mxu0 0.0
        %1305 = vmatpush1.xpose.msra.mxu0 0.0
        %1306 = vmatprep.subr.mxu0 0.0
        %1307 = vmatpush1.xpose.msra.mxu0 0.0
        %1308 = vmatprep.subr.mxu0 0.0
        %1309 = vmatpush1.xpose.msra.mxu0 0.0
        %1310 = vmatprep.subr.mxu0 0.0
        %1311 = vmatpush1.xpose.msra.mxu0 0.0
        %1312 = vmatprep.subr.mxu0 0.0
        %1313 = vmatpush1.xpose.msra.mxu0 0.0
        %1314 = vmatprep.subr.mxu0 0.0
        %1315 = vmatpush1.xpose.msra.mxu0 0.0
        %1316 = vmatprep.subr.mxu0 0.0
        %1317 = vmatpush1.xpose.msra.mxu0 0.0
        %1318 = vmatprep.subr.mxu0 0.0
        %1319 = vmatpush1.xpose.msra.mxu0 0.0
        %1320 = vmatprep.subr.mxu0 0.0
        %1321 = vmatpush1.xpose.msra.mxu0 0.0
        %1322 = vmatprep.subr.mxu0 0.0
        %1323 = vmatpush1.xpose.msra.mxu0 0.0
        %1324 = vmatprep.subr.mxu0 0.0
        %1325 = vmatpush1.xpose.msra.mxu0 0.0
        %1326 = vmatprep.subr.mxu0 0.0
        %1327 = vmatpush1.xpose.msra.mxu0 0.0
        %1328 = vmatprep.subr.mxu0 0.0
        %1329 = vmatpush1.xpose.msra.mxu0 0.0
        %1330 = vmatprep.subr.mxu0 0.0
        %1331 = vmatpush1.xpose.msra.mxu0 0.0
        %1332 = vmatprep.subr.mxu0 0.0
        %1333 = vmatpush1.xpose.msra.mxu0 0.0
        %1334 = vmatprep.subr.mxu0 0.0
        %1335 = vmatpush1.xpose.msra.mxu0 0.0
        %1336 = vmatprep.subr.mxu0 0.0
        %1337 = vmatpush1.xpose.msra.mxu0 0.0
        %1338 = vmatprep.subr.mxu0 0.0
        %1339 = vmatpush1.xpose.msra.mxu0 0.0
        %1340 = vmatprep.subr.mxu0 0.0
        %1341 = vmatpush1.xpose.msra.mxu0 0.0
        %1342 = vmatprep.subr.mxu0 0.0
        %1343 = vmatpush1.xpose.msra.mxu0 0.0
        %1344 = vmatprep.mubr.f32.mxu0 0.0
        %1345 = vmatmul.mubr.f32.gmra.mrb[0].mxu0 %v1276
        %v1346 = vpop.f32.mrb[0].mxu0
        %v1347 = vadd.f32 0.0, %v1346
        %v1348 = vpop.f32.mrb[0].mxu0
        %1349 = vdwg.mxu0
        %v1351 = vsel %vm1041, %v753, 0
        %v1354 = vsel %vm1041, %v895, 0
        %1356 = vmatprep.subr.mxu0 0.0
        %1357 = vmatpush1.xpose.msra.mxu0 %v1354
        %1358 = vmatprep.subr.mxu0 0.0
        %1359 = vmatpush1.xpose.msra.mxu0 0.0
        %1360 = vmatprep.subr.mxu0 0.0
        %1361 = vmatpush1.xpose.msra.mxu0 0.0
        %1362 = vmatprep.subr.mxu0 0.0
        %1363 = vmatpush1.xpose.msra.mxu0 0.0
        %1364 = vmatprep.subr.mxu0 0.0
        %1365 = vmatpush1.xpose.msra.mxu0 0.0
        %1366 = vmatprep.subr.mxu0 0.0
        %1367 = vmatpush1.xpose.msra.mxu0 0.0
        %1368 = vmatprep.subr.mxu0 0.0
        %1369 = vmatpush1.xpose.msra.mxu0 0.0
        %1370 = vmatprep.subr.mxu0 0.0
        %1371 = vmatpush1.xpose.msra.mxu0 0.0
        %1372 = vmatprep.subr.mxu0 0.0
        %1373 = vmatpush1.xpose.msra.mxu0 0.0
        %1374 = vmatprep.subr.mxu0 0.0
        %1375 = vmatpush1.xpose.msra.mxu0 0.0
        %1376 = vmatprep.subr.mxu0 0.0
        %1377 = vmatpush1.xpose.msra.mxu0 0.0
        %1378 = vmatprep.subr.mxu0 0.0
        %1379 = vmatpush1.xpose.msra.mxu0 0.0
        %1380 = vmatprep.subr.mxu0 0.0
        %1381 = vmatpush1.xpose.msra.mxu0 0.0
        %1382 = vmatprep.subr.mxu0 0.0
        %1383 = vmatpush1.xpose.msra.mxu0 0.0
        %1384 = vmatprep.subr.mxu0 0.0
        %1385 = vmatpush1.xpose.msra.mxu0 0.0
        %1386 = vmatprep.subr.mxu0 0.0
        %1387 = vmatpush1.xpose.msra.mxu0 0.0
        %1388 = vmatprep.subr.mxu0 0.0
        %1389 = vmatpush1.xpose.msra.mxu0 0.0
        %1390 = vmatprep.subr.mxu0 0.0
        %1391 = vmatpush1.xpose.msra.mxu0 0.0
        %1392 = vmatprep.subr.mxu0 0.0
        %1393 = vmatpush1.xpose.msra.mxu0 0.0
        %1394 = vmatprep.subr.mxu0 0.0
        %1395 = vmatpush1.xpose.msra.mxu0 0.0
        %1396 = vmatprep.subr.mxu0 0.0
        %1397 = vmatpush1.xpose.msra.mxu0 0.0
        %1398 = vmatprep.subr.mxu0 0.0
        %1399 = vmatpush1.xpose.msra.mxu0 0.0
        %1400 = vmatprep.subr.mxu0 0.0
        %1401 = vmatpush1.xpose.msra.mxu0 0.0
        %1402 = vmatprep.subr.mxu0 0.0
        %1403 = vmatpush1.xpose.msra.mxu0 0.0
        %1404 = vmatprep.subr.mxu0 0.0
        %1405 = vmatpush1.xpose.msra.mxu0 0.0
        %1406 = vmatprep.subr.mxu0 0.0
        %1407 = vmatpush1.xpose.msra.mxu0 0.0
        %1408 = vmatprep.subr.mxu0 0.0
        %1409 = vmatpush1.xpose.msra.mxu0 0.0
        %1410 = vmatprep.subr.mxu0 0.0
        %1411 = vmatpush1.xpose.msra.mxu0 0.0
        %1412 = vmatprep.subr.mxu0 0.0
        %1413 = vmatpush1.xpose.msra.mxu0 0.0
        %1414 = vmatprep.subr.mxu0 0.0
        %1415 = vmatpush1.xpose.msra.mxu0 0.0
        %1416 = vmatprep.subr.mxu0 0.0
        %1417 = vmatpush1.xpose.msra.mxu0 0.0
        %1418 = vmatprep.subr.mxu0 0.0
        %1419 = vmatpush1.xpose.msra.mxu0 0.0
        %1420 = vmatprep.mubr.f32.mxu0 0.0
        %1421 = vmatmul.mubr.f32.gmra.mrb[0].mxu0 %v1351
        %v1422 = vpop.f32.mrb[0].mxu0
        %v1423 = vadd.f32 0.0, %v1422
        %v1424 = vpop.f32.mrb[0].mxu0
        %1425 = vdwg.mxu0
        %1426 = vrot.lane.b32.xlu0 %v753, 64
        %v1427 = vpop.permute.xlu0 %1426
        %1428 = vrot.lane.b32.xlu0 %v895, 64
        %v1429 = vpop.permute.xlu0 %1428
        %v1430 = vsel %vm1041, %v1427, 0
        %v1432 = vsel %vm1041, %v1429, 0
        %1434 = vmatprep.subr.mxu0 0.0
        %1435 = vmatpush1.xpose.msra.mxu0 %v1432
        %1436 = vmatprep.subr.mxu0 0.0
        %1437 = vmatpush1.xpose.msra.mxu0 0.0
        %1438 = vmatprep.subr.mxu0 0.0
        %1439 = vmatpush1.xpose.msra.mxu0 0.0
        %1440 = vmatprep.subr.mxu0 0.0
        %1441 = vmatpush1.xpose.msra.mxu0 0.0
        %1442 = vmatprep.subr.mxu0 0.0
        %1443 = vmatpush1.xpose.msra.mxu0 0.0
        %1444 = vmatprep.subr.mxu0 0.0
        %1445 = vmatpush1.xpose.msra.mxu0 0.0
        %1446 = vmatprep.subr.mxu0 0.0
        %1447 = vmatpush1.xpose.msra.mxu0 0.0
        %1448 = vmatprep.subr.mxu0 0.0
        %1449 = vmatpush1.xpose.msra.mxu0 0.0
        %1450 = vmatprep.subr.mxu0 0.0
        %1451 = vmatpush1.xpose.msra.mxu0 0.0
        %1452 = vmatprep.subr.mxu0 0.0
        %1453 = vmatpush1.xpose.msra.mxu0 0.0
        %1454 = vmatprep.subr.mxu0 0.0
        %1455 = vmatpush1.xpose.msra.mxu0 0.0
        %1456 = vmatprep.subr.mxu0 0.0
        %1457 = vmatpush1.xpose.msra.mxu0 0.0
        %1458 = vmatprep.subr.mxu0 0.0
        %1459 = vmatpush1.xpose.msra.mxu0 0.0
        %1460 = vmatprep.subr.mxu0 0.0
        %1461 = vmatpush1.xpose.msra.mxu0 0.0
        %1462 = vmatprep.subr.mxu0 0.0
        %1463 = vmatpush1.xpose.msra.mxu0 0.0
        %1464 = vmatprep.subr.mxu0 0.0
        %1465 = vmatpush1.xpose.msra.mxu0 0.0
        %1466 = vmatprep.subr.mxu0 0.0
        %1467 = vmatpush1.xpose.msra.mxu0 0.0
        %1468 = vmatprep.subr.mxu0 0.0
        %1469 = vmatpush1.xpose.msra.mxu0 0.0
        %1470 = vmatprep.subr.mxu0 0.0
        %1471 = vmatpush1.xpose.msra.mxu0 0.0
        %1472 = vmatprep.subr.mxu0 0.0
        %1473 = vmatpush1.xpose.msra.mxu0 0.0
        %1474 = vmatprep.subr.mxu0 0.0
        %1475 = vmatpush1.xpose.msra.mxu0 0.0
        %1476 = vmatprep.subr.mxu0 0.0
        %1477 = vmatpush1.xpose.msra.mxu0 0.0
        %1478 = vmatprep.subr.mxu0 0.0
        %1479 = vmatpush1.xpose.msra.mxu0 0.0
        %1480 = vmatprep.subr.mxu0 0.0
        %1481 = vmatpush1.xpose.msra.mxu0 0.0
        %1482 = vmatprep.subr.mxu0 0.0
        %1483 = vmatpush1.xpose.msra.mxu0 0.0
        %1484 = vmatprep.subr.mxu0 0.0
        %1485 = vmatpush1.xpose.msra.mxu0 0.0
        %1486 = vmatprep.subr.mxu0 0.0
        %1487 = vmatpush1.xpose.msra.mxu0 0.0
        %1488 = vmatprep.subr.mxu0 0.0
        %1489 = vmatpush1.xpose.msra.mxu0 0.0
        %1490 = vmatprep.subr.mxu0 0.0
        %1491 = vmatpush1.xpose.msra.mxu0 0.0
        %1492 = vmatprep.subr.mxu0 0.0
        %1493 = vmatpush1.xpose.msra.mxu0 0.0
        %1494 = vmatprep.subr.mxu0 0.0
        %1495 = vmatpush1.xpose.msra.mxu0 0.0
        %1496 = vmatprep.subr.mxu0 0.0
        %1497 = vmatpush1.xpose.msra.mxu0 0.0
        %1498 = vmatprep.mubr.f32.mxu0 0.0
        %1499 = vmatmul.mubr.f32.gmra.mrb[0].mxu0 %v1430
        %v1500 = vpop.f32.mrb[0].mxu0
        %v1501 = vadd.f32 0.0, %v1500
        %v1502 = vpop.f32.mrb[0].mxu0
        %1503 = vdwg.mxu0
        %v1505 = vsel %vm1041, %v755, 0
        %v1508 = vsel %vm1041, %v897, 0
        %1510 = vmatprep.subr.mxu0 0.0
        %1511 = vmatpush1.xpose.msra.mxu0 %v1508
        %1512 = vmatprep.subr.mxu0 0.0
        %1513 = vmatpush1.xpose.msra.mxu0 0.0
        %1514 = vmatprep.subr.mxu0 0.0
        %1515 = vmatpush1.xpose.msra.mxu0 0.0
        %1516 = vmatprep.subr.mxu0 0.0
        %1517 = vmatpush1.xpose.msra.mxu0 0.0
        %1518 = vmatprep.subr.mxu0 0.0
        %1519 = vmatpush1.xpose.msra.mxu0 0.0
        %1520 = vmatprep.subr.mxu0 0.0
        %1521 = vmatpush1.xpose.msra.mxu0 0.0
        %1522 = vmatprep.subr.mxu0 0.0
        %1523 = vmatpush1.xpose.msra.mxu0 0.0
        %1524 = vmatprep.subr.mxu0 0.0
        %1525 = vmatpush1.xpose.msra.mxu0 0.0
        %1526 = vmatprep.subr.mxu0 0.0
        %1527 = vmatpush1.xpose.msra.mxu0 0.0
        %1528 = vmatprep.subr.mxu0 0.0
        %1529 = vmatpush1.xpose.msra.mxu0 0.0
        %1530 = vmatprep.subr.mxu0 0.0
        %1531 = vmatpush1.xpose.msra.mxu0 0.0
        %1532 = vmatprep.subr.mxu0 0.0
        %1533 = vmatpush1.xpose.msra.mxu0 0.0
        %1534 = vmatprep.subr.mxu0 0.0
        %1535 = vmatpush1.xpose.msra.mxu0 0.0
        %1536 = vmatprep.subr.mxu0 0.0
        %1537 = vmatpush1.xpose.msra.mxu0 0.0
        %1538 = vmatprep.subr.mxu0 0.0
        %1539 = vmatpush1.xpose.msra.mxu0 0.0
        %1540 = vmatprep.subr.mxu0 0.0
        %1541 = vmatpush1.xpose.msra.mxu0 0.0
        %1542 = vmatprep.subr.mxu0 0.0
        %1543 = vmatpush1.xpose.msra.mxu0 0.0
        %1544 = vmatprep.subr.mxu0 0.0
        %1545 = vmatpush1.xpose.msra.mxu0 0.0
        %1546 = vmatprep.subr.mxu0 0.0
        %1547 = vmatpush1.xpose.msra.mxu0 0.0
        %1548 = vmatprep.subr.mxu0 0.0
        %1549 = vmatpush1.xpose.msra.mxu0 0.0
        %1550 = vmatprep.subr.mxu0 0.0
        %1551 = vmatpush1.xpose.msra.mxu0 0.0
        %1552 = vmatprep.subr.mxu0 0.0
        %1553 = vmatpush1.xpose.msra.mxu0 0.0
        %1554 = vmatprep.subr.mxu0 0.0
        %1555 = vmatpush1.xpose.msra.mxu0 0.0
        %1556 = vmatprep.subr.mxu0 0.0
        %1557 = vmatpush1.xpose.msra.mxu0 0.0
        %1558 = vmatprep.subr.mxu0 0.0
        %1559 = vmatpush1.xpose.msra.mxu0 0.0
        %1560 = vmatprep.subr.mxu0 0.0
        %1561 = vmatpush1.xpose.msra.mxu0 0.0
        %1562 = vmatprep.subr.mxu0 0.0
        %1563 = vmatpush1.xpose.msra.mxu0 0.0
        %1564 = vmatprep.subr.mxu0 0.0
        %1565 = vmatpush1.xpose.msra.mxu0 0.0
        %1566 = vmatprep.subr.mxu0 0.0
        %1567 = vmatpush1.xpose.msra.mxu0 0.0
        %1568 = vmatprep.subr.mxu0 0.0
        %1569 = vmatpush1.xpose.msra.mxu0 0.0
        %1570 = vmatprep.subr.mxu0 0.0
        %1571 = vmatpush1.xpose.msra.mxu0 0.0
        %1572 = vmatprep.subr.mxu0 0.0
        %1573 = vmatpush1.xpose.msra.mxu0 0.0
        %1574 = vmatprep.mubr.f32.mxu0 0.0
        %1575 = vmatmul.mubr.f32.gmra.mrb[0].mxu0 %v1505
        %v1576 = vpop.f32.mrb[0].mxu0
        %v1577 = vadd.f32 0.0, %v1576
        %v1578 = vpop.f32.mrb[0].mxu0
        %1579 = vdwg.mxu0
        %1580 = vrot.lane.b32.xlu0 %v755, 64
        %v1581 = vpop.permute.xlu0 %1580
        %1582 = vrot.lane.b32.xlu0 %v897, 64
        %v1583 = vpop.permute.xlu0 %1582
        %v1584 = vsel %vm1041, %v1581, 0
        %v1586 = vsel %vm1041, %v1583, 0
        %1588 = vmatprep.subr.mxu0 0.0
        %1589 = vmatpush1.xpose.msra.mxu0 %v1586
        %1590 = vmatprep.subr.mxu0 0.0
        %1591 = vmatpush1.xpose.msra.mxu0 0.0
        %1592 = vmatprep.subr.mxu0 0.0
        %1593 = vmatpush1.xpose.msra.mxu0 0.0
        %1594 = vmatprep.subr.mxu0 0.0
        %1595 = vmatpush1.xpose.msra.mxu0 0.0
        %1596 = vmatprep.subr.mxu0 0.0
        %1597 = vmatpush1.xpose.msra.mxu0 0.0
        %1598 = vmatprep.subr.mxu0 0.0
        %1599 = vmatpush1.xpose.msra.mxu0 0.0
        %1600 = vmatprep.subr.mxu0 0.0
        %1601 = vmatpush1.xpose.msra.mxu0 0.0
        %1602 = vmatprep.subr.mxu0 0.0
        %1603 = vmatpush1.xpose.msra.mxu0 0.0
        %1604 = vmatprep.subr.mxu0 0.0
        %1605 = vmatpush1.xpose.msra.mxu0 0.0
        %1606 = vmatprep.subr.mxu0 0.0
        %1607 = vmatpush1.xpose.msra.mxu0 0.0
        %1608 = vmatprep.subr.mxu0 0.0
        %1609 = vmatpush1.xpose.msra.mxu0 0.0
        %1610 = vmatprep.subr.mxu0 0.0
        %1611 = vmatpush1.xpose.msra.mxu0 0.0
        %1612 = vmatprep.subr.mxu0 0.0
        %1613 = vmatpush1.xpose.msra.mxu0 0.0
        %1614 = vmatprep.subr.mxu0 0.0
        %1615 = vmatpush1.xpose.msra.mxu0 0.0
        %1616 = vmatprep.subr.mxu0 0.0
        %1617 = vmatpush1.xpose.msra.mxu0 0.0
        %1618 = vmatprep.subr.mxu0 0.0
        %1619 = vmatpush1.xpose.msra.mxu0 0.0
        %1620 = vmatprep.subr.mxu0 0.0
        %1621 = vmatpush1.xpose.msra.mxu0 0.0
        %1622 = vmatprep.subr.mxu0 0.0
        %1623 = vmatpush1.xpose.msra.mxu0 0.0
        %1624 = vmatprep.subr.mxu0 0.0
        %1625 = vmatpush1.xpose.msra.mxu0 0.0
        %1626 = vmatprep.subr.mxu0 0.0
        %1627 = vmatpush1.xpose.msra.mxu0 0.0
        %1628 = vmatprep.subr.mxu0 0.0
        %1629 = vmatpush1.xpose.msra.mxu0 0.0
        %1630 = vmatprep.subr.mxu0 0.0
        %1631 = vmatpush1.xpose.msra.mxu0 0.0
        %1632 = vmatprep.subr.mxu0 0.0
        %1633 = vmatpush1.xpose.msra.mxu0 0.0
        %1634 = vmatprep.subr.mxu0 0.0
        %1635 = vmatpush1.xpose.msra.mxu0 0.0
        %1636 = vmatprep.subr.mxu0 0.0
        %1637 = vmatpush1.xpose.msra.mxu0 0.0
        %1638 = vmatprep.subr.mxu0 0.0
        %1639 = vmatpush1.xpose.msra.mxu0 0.0
        %1640 = vmatprep.subr.mxu0 0.0
        %1641 = vmatpush1.xpose.msra.mxu0 0.0
        %1642 = vmatprep.subr.mxu0 0.0
        %1643 = vmatpush1.xpose.msra.mxu0 0.0
        %1644 = vmatprep.subr.mxu0 0.0
        %1645 = vmatpush1.xpose.msra.mxu0 0.0
        %1646 = vmatprep.subr.mxu0 0.0
        %1647 = vmatpush1.xpose.msra.mxu0 0.0
        %1648 = vmatprep.subr.mxu0 0.0
        %1649 = vmatpush1.xpose.msra.mxu0 0.0
        %1650 = vmatprep.subr.mxu0 0.0
        %1651 = vmatpush1.xpose.msra.mxu0 0.0
        %1652 = vmatprep.mubr.f32.mxu0 0.0
        %1653 = vmatmul.mubr.f32.gmra.mrb[0].mxu0 %v1584
        %v1654 = vpop.f32.mrb[0].mxu0
        %v1655 = vadd.f32 0.0, %v1654
        %v1656 = vpop.f32.mrb[0].mxu0
        %1657 = vdwg.mxu0
        %1659 = vrot.lane.b32.xlu0 %v1193, 8
        %v1660 = vpop.permute.xlu0 %1659
        %1663 = vrot.lane.b32.xlu0 %v1269, 16
        %v1664 = vpop.permute.xlu0 %1663
        %1667 = vrot.lane.b32.xlu0 %v1347, 24
        %v1668 = vpop.permute.xlu0 %1667
        %1671 = vrot.lane.b32.xlu0 %v1423, 32
        %v1672 = vpop.permute.xlu0 %1671
        %1675 = vrot.lane.b32.xlu0 %v1501, 40
        %v1676 = vpop.permute.xlu0 %1675
        %1679 = vrot.lane.b32.xlu0 %v1577, 48
        %v1680 = vpop.permute.xlu0 %1679
        %1683 = vrot.lane.b32.xlu0 %v1655, 56
        %v1684 = vpop.permute.xlu0 %1683
        %vm1686 = vcmask 64512
        %v1687 = vsel %vm1686, %v1115, %v1660
        %vm1688 = vcmask 130048
        %v1689 = vsel %vm1688, %v1687, %v1664
        %vm1690 = vcmask 195584
        %v1691 = vsel %vm1690, %v1689, %v1668
        %vm1692 = vcmask 261120
        %v1693 = vsel %vm1692, %v1691, %v1672
        %vm1694 = vcmask 326656
        %v1695 = vsel %vm1694, %v1693, %v1676
        %vm1696 = vcmask 392192
        %v1697 = vsel %vm1696, %v1695, %v1680
        %vm1698 = vcmask 457728
        %v1699 = vsel %vm1698, %v1697, %v1684
        %v1700 = vsel %vm1041, %v1699, -inf
        %1701 = vmax.xlane.f32.xlu0 %v1700
        %v1702 = vpop.xlane.xlu0 %1701
        %v1703 = vsub.f32 %v1699, %v1702
        %v1704 = vmul.f32 %v1703, 1.442695
        %v1705 = vpow.pop %v1704
        %v1706 = vsel %vm1686, %v1705, 0.0
        %1707 = vadd.xlane.f32.xlu0 %v1706
        %v1708 = vpop.xlane.xlu0 %1707
        %v1709 = vrcp.pop %v1708
        %v1711 = vsel %vm1686, %v1705, 0
        %1713 = vmatprep.subr.mxu0 0.0
        %1714 = vmatpush1.msra.mxu0 %v966
        %1715 = vmatprep.subr.mxu0 0.0
        %1716 = vmatpush1.msra.mxu0 0.0
        %1717 = vmatprep.subr.mxu0 0.0
        %1718 = vmatpush1.msra.mxu0 0.0
        %1719 = vmatprep.subr.mxu0 0.0
        %1720 = vmatpush1.msra.mxu0 0.0
        %1721 = vmatprep.subr.mxu0 0.0
        %1722 = vmatpush1.msra.mxu0 0.0
        %1723 = vmatprep.subr.mxu0 0.0
        %1724 = vmatpush1.msra.mxu0 0.0
        %1725 = vmatprep.subr.mxu0 0.0
        %1726 = vmatpush1.msra.mxu0 0.0
        %1727 = vmatprep.subr.mxu0 0.0
        %1728 = vmatpush1.msra.mxu0 0.0
        %1729 = vmatprep.subr.mxu0 0.0
        %1730 = vmatpush1.msra.mxu0 0.0
        %1731 = vmatprep.subr.mxu0 0.0
        %1732 = vmatpush1.msra.mxu0 0.0
        %1733 = vmatprep.subr.mxu0 0.0
        %1734 = vmatpush1.msra.mxu0 0.0
        %1735 = vmatprep.subr.mxu0 0.0
        %1736 = vmatpush1.msra.mxu0 0.0
        %1737 = vmatprep.subr.mxu0 0.0
        %1738 = vmatpush1.msra.mxu0 0.0
        %1739 = vmatprep.subr.mxu0 0.0
        %1740 = vmatpush1.msra.mxu0 0.0
        %1741 = vmatprep.subr.mxu0 0.0
        %1742 = vmatpush1.msra.mxu0 0.0
        %1743 = vmatprep.subr.mxu0 0.0
        %1744 = vmatpush1.msra.mxu0 0.0
        %1745 = vmatprep.subr.mxu0 0.0
        %1746 = vmatpush1.msra.mxu0 0.0
        %1747 = vmatprep.subr.mxu0 0.0
        %1748 = vmatpush1.msra.mxu0 0.0
        %1749 = vmatprep.subr.mxu0 0.0
        %1750 = vmatpush1.msra.mxu0 0.0
        %1751 = vmatprep.subr.mxu0 0.0
        %1752 = vmatpush1.msra.mxu0 0.0
        %1753 = vmatprep.subr.mxu0 0.0
        %1754 = vmatpush1.msra.mxu0 0.0
        %1755 = vmatprep.subr.mxu0 0.0
        %1756 = vmatpush1.msra.mxu0 0.0
        %1757 = vmatprep.subr.mxu0 0.0
        %1758 = vmatpush1.msra.mxu0 0.0
        %1759 = vmatprep.subr.mxu0 0.0
        %1760 = vmatpush1.msra.mxu0 0.0
        %1761 = vmatprep.subr.mxu0 0.0
        %1762 = vmatpush1.msra.mxu0 0.0
        %1763 = vmatprep.subr.mxu0 0.0
        %1764 = vmatpush1.msra.mxu0 0.0
        %1765 = vmatprep.subr.mxu0 0.0
        %1766 = vmatpush1.msra.mxu0 0.0
        %1767 = vmatprep.subr.mxu0 0.0
        %1768 = vmatpush1.msra.mxu0 0.0
        %1769 = vmatprep.subr.mxu0 0.0
        %1770 = vmatpush1.msra.mxu0 0.0
        %1771 = vmatprep.subr.mxu0 0.0
        %1772 = vmatpush1.msra.mxu0 0.0
        %1773 = vmatprep.subr.mxu0 0.0
        %1774 = vmatpush1.msra.mxu0 0.0
        %1775 = vmatprep.subr.mxu0 0.0
        %1776 = vmatpush1.msra.mxu0 0.0
        %1777 = vmatprep.mubr.f32.mxu0 0.0
        %1778 = vmatmul.mubr.f32.gmra.mrb[0].mxu0 %v1711
        %v1779 = vpop.f32.mrb[0].mxu0
        %v1780 = vadd.f32 0.0, %v1779
        %v1781 = vpop.f32.mrb[0].mxu0
        %1782 = vdwg.mxu0
        %v1783 = vmul.f32 %v1780, %v1709
        %1784 = vrot.lane.b32.xlu0 %v1705, 120
        %v1785 = vpop.permute.xlu0 %1784
        %v1787 = vsel %vm1686, %v1785, 0.0
        %1788 = vadd.xlane.f32.xlu0 %v1787
        %v1789 = vpop.xlane.xlu0 %1788
        %v1790 = vrcp.pop %v1789
        %1792 = vrot.lane.b32.xlu0 %v966, 64
        %v1793 = vpop.permute.xlu0 %1792
        %v1795 = vsel %vm1686, %v1785, 0
        %1797 = vmatprep.subr.mxu0 0.0
        %1798 = vmatpush1.msra.mxu0 %v1793
        %1799 = vmatprep.subr.mxu0 0.0
        %1800 = vmatpush1.msra.mxu0 0.0
        %1801 = vmatprep.subr.mxu0 0.0
        %1802 = vmatpush1.msra.mxu0 0.0
        %1803 = vmatprep.subr.mxu0 0.0
        %1804 = vmatpush1.msra.mxu0 0.0
        %1805 = vmatprep.subr.mxu0 0.0
        %1806 = vmatpush1.msra.mxu0 0.0
        %1807 = vmatprep.subr.mxu0 0.0
        %1808 = vmatpush1.msra.mxu0 0.0
        %1809 = vmatprep.subr.mxu0 0.0
        %1810 = vmatpush1.msra.mxu0 0.0
        %1811 = vmatprep.subr.mxu0 0.0
        %1812 = vmatpush1.msra.mxu0 0.0
        %1813 = vmatprep.subr.mxu0 0.0
        %1814 = vmatpush1.msra.mxu0 0.0
        %1815 = vmatprep.subr.mxu0 0.0
        %1816 = vmatpush1.msra.mxu0 0.0
        %1817 = vmatprep.subr.mxu0 0.0
        %1818 = vmatpush1.msra.mxu0 0.0
        %1819 = vmatprep.subr.mxu0 0.0
        %1820 = vmatpush1.msra.mxu0 0.0
        %1821 = vmatprep.subr.mxu0 0.0
        %1822 = vmatpush1.msra.mxu0 0.0
        %1823 = vmatprep.subr.mxu0 0.0
        %1824 = vmatpush1.msra.mxu0 0.0
        %1825 = vmatprep.subr.mxu0 0.0
        %1826 = vmatpush1.msra.mxu0 0.0
        %1827 = vmatprep.subr.mxu0 0.0
        %1828 = vmatpush1.msra.mxu0 0.0
        %1829 = vmatprep.subr.mxu0 0.0
        %1830 = vmatpush1.msra.mxu0 0.0
        %1831 = vmatprep.subr.mxu0 0.0
        %1832 = vmatpush1.msra.mxu0 0.0
        %1833 = vmatprep.subr.mxu0 0.0
        %1834 = vmatpush1.msra.mxu0 0.0
        %1835 = vmatprep.subr.mxu0 0.0
        %1836 = vmatpush1.msra.mxu0 0.0
        %1837 = vmatprep.subr.mxu0 0.0
        %1838 = vmatpush1.msra.mxu0 0.0
        %1839 = vmatprep.subr.mxu0 0.0
        %1840 = vmatpush1.msra.mxu0 0.0
        %1841 = vmatprep.subr.mxu0 0.0
        %1842 = vmatpush1.msra.mxu0 0.0
        %1843 = vmatprep.subr.mxu0 0.0
        %1844 = vmatpush1.msra.mxu0 0.0
        %1845 = vmatprep.subr.mxu0 0.0
        %1846 = vmatpush1.msra.mxu0 0.0
        %1847 = vmatprep.subr.mxu0 0.0
        %1848 = vmatpush1.msra.mxu0 0.0
        %1849 = vmatprep.subr.mxu0 0.0
        %1850 = vmatpush1.msra.mxu0 0.0
        %1851 = vmatprep.subr.mxu0 0.0
        %1852 = vmatpush1.msra.mxu0 0.0
        %1853 = vmatprep.subr.mxu0 0.0
        %1854 = vmatpush1.msra.mxu0 0.0
        %1855 = vmatprep.subr.mxu0 0.0
        %1856 = vmatpush1.msra.mxu0 0.0
        %1857 = vmatprep.subr.mxu0 0.0
        %1858 = vmatpush1.msra.mxu0 0.0
        %1859 = vmatprep.subr.mxu0 0.0
        %1860 = vmatpush1.msra.mxu0 0.0
        %1861 = vmatprep.mubr.f32.mxu0 0.0
        %1862 = vmatmul.mubr.f32.gmra.mrb[0].mxu0 %v1795
        %v1863 = vpop.f32.mrb[0].mxu0
        %v1864 = vadd.f32 0.0, %v1863
        %v1865 = vpop.f32.mrb[0].mxu0
        %1866 = vdwg.mxu0
        %v1867 = vmul.f32 %v1864, %v1790
        %1868 = vrot.lane.b32.xlu0 %v1705, 112
        %v1869 = vpop.permute.xlu0 %1868
        %v1871 = vsel %vm1686, %v1869, 0.0
        %1872 = vadd.xlane.f32.xlu0 %v1871
        %v1873 = vpop.xlane.xlu0 %1872
        %v1874 = vrcp.pop %v1873
        %v1875 = vsel %vm1686, %v1869, 0
        %1877 = vmatprep.subr.mxu0 0.0
        %1878 = vmatpush1.msra.mxu0 %v968
        %1879 = vmatprep.subr.mxu0 0.0
        %1880 = vmatpush1.msra.mxu0 0.0
        %1881 = vmatprep.subr.mxu0 0.0
        %1882 = vmatpush1.msra.mxu0 0.0
        %1883 = vmatprep.subr.mxu0 0.0
        %1884 = vmatpush1.msra.mxu0 0.0
        %1885 = vmatprep.subr.mxu0 0.0
        %1886 = vmatpush1.msra.mxu0 0.0
        %1887 = vmatprep.subr.mxu0 0.0
        %1888 = vmatpush1.msra.mxu0 0.0
        %1889 = vmatprep.subr.mxu0 0.0
        %1890 = vmatpush1.msra.mxu0 0.0
        %1891 = vmatprep.subr.mxu0 0.0
        %1892 = vmatpush1.msra.mxu0 0.0
        %1893 = vmatprep.subr.mxu0 0.0
        %1894 = vmatpush1.msra.mxu0 0.0
        %1895 = vmatprep.subr.mxu0 0.0
        %1896 = vmatpush1.msra.mxu0 0.0
        %1897 = vmatprep.subr.mxu0 0.0
        %1898 = vmatpush1.msra.mxu0 0.0
        %1899 = vmatprep.subr.mxu0 0.0
        %1900 = vmatpush1.msra.mxu0 0.0
        %1901 = vmatprep.subr.mxu0 0.0
        %1902 = vmatpush1.msra.mxu0 0.0
        %1903 = vmatprep.subr.mxu0 0.0
        %1904 = vmatpush1.msra.mxu0 0.0
        %1905 = vmatprep.subr.mxu0 0.0
        %1906 = vmatpush1.msra.mxu0 0.0
        %1907 = vmatprep.subr.mxu0 0.0
        %1908 = vmatpush1.msra.mxu0 0.0
        %1909 = vmatprep.subr.mxu0 0.0
        %1910 = vmatpush1.msra.mxu0 0.0
        %1911 = vmatprep.subr.mxu0 0.0
        %1912 = vmatpush1.msra.mxu0 0.0
        %1913 = vmatprep.subr.mxu0 0.0
        %1914 = vmatpush1.msra.mxu0 0.0
        %1915 = vmatprep.subr.mxu0 0.0
        %1916 = vmatpush1.msra.mxu0 0.0
        %1917 = vmatprep.subr.mxu0 0.0
        %1918 = vmatpush1.msra.mxu0 0.0
        %1919 = vmatprep.subr.mxu0 0.0
        %1920 = vmatpush1.msra.mxu0 0.0
        %1921 = vmatprep.subr.mxu0 0.0
        %1922 = vmatpush1.msra.mxu0 0.0
        %1923 = vmatprep.subr.mxu0 0.0
        %1924 = vmatpush1.msra.mxu0 0.0
        %1925 = vmatprep.subr.mxu0 0.0
        %1926 = vmatpush1.msra.mxu0 0.0
        %1927 = vmatprep.subr.mxu0 0.0
        %1928 = vmatpush1.msra.mxu0 0.0
        %1929 = vmatprep.subr.mxu0 0.0
        %1930 = vmatpush1.msra.mxu0 0.0
        %1931 = vmatprep.subr.mxu0 0.0
        %1932 = vmatpush1.msra.mxu0 0.0
        %1933 = vmatprep.subr.mxu0 0.0
        %1934 = vmatpush1.msra.mxu0 0.0
        %1935 = vmatprep.subr.mxu0 0.0
        %1936 = vmatpush1.msra.mxu0 0.0
        %1937 = vmatprep.subr.mxu0 0.0
        %1938 = vmatpush1.msra.mxu0 0.0
        %1939 = vmatprep.subr.mxu0 0.0
        %1940 = vmatpush1.msra.mxu0 0.0
        %1941 = vmatprep.mubr.f32.mxu0 0.0
        %1942 = vmatmul.mubr.f32.gmra.mrb[0].mxu0 %v1875
        %v1943 = vpop.f32.mrb[0].mxu0
        %v1944 = vadd.f32 0.0, %v1943
        %v1945 = vpop.f32.mrb[0].mxu0
        %1946 = vdwg.mxu0
        %v1947 = vmul.f32 %v1944, %v1874
        %1948 = vrot.lane.b32.xlu0 %v1705, 104
        %v1949 = vpop.permute.xlu0 %1948
        %v1951 = vsel %vm1686, %v1949, 0.0
        %1952 = vadd.xlane.f32.xlu0 %v1951
        %v1953 = vpop.xlane.xlu0 %1952
        %v1954 = vrcp.pop %v1953
        %1956 = vrot.lane.b32.xlu0 %v968, 64
        %v1957 = vpop.permute.xlu0 %1956
        %v1959 = vsel %vm1686, %v1949, 0
        %1961 = vmatprep.subr.mxu0 0.0
        %1962 = vmatpush1.msra.mxu0 %v1957
        %1963 = vmatprep.subr.mxu0 0.0
        %1964 = vmatpush1.msra.mxu0 0.0
        %1965 = vmatprep.subr.mxu0 0.0
        %1966 = vmatpush1.msra.mxu0 0.0
        %1967 = vmatprep.subr.mxu0 0.0
        %1968 = vmatpush1.msra.mxu0 0.0
        %1969 = vmatprep.subr.mxu0 0.0
        %1970 = vmatpush1.msra.mxu0 0.0
        %1971 = vmatprep.subr.mxu0 0.0
        %1972 = vmatpush1.msra.mxu0 0.0
        %1973 = vmatprep.subr.mxu0 0.0
        %1974 = vmatpush1.msra.mxu0 0.0
        %1975 = vmatprep.subr.mxu0 0.0
        %1976 = vmatpush1.msra.mxu0 0.0
        %1977 = vmatprep.subr.mxu0 0.0
        %1978 = vmatpush1.msra.mxu0 0.0
        %1979 = vmatprep.subr.mxu0 0.0
        %1980 = vmatpush1.msra.mxu0 0.0
        %1981 = vmatprep.subr.mxu0 0.0
        %1982 = vmatpush1.msra.mxu0 0.0
        %1983 = vmatprep.subr.mxu0 0.0
        %1984 = vmatpush1.msra.mxu0 0.0
        %1985 = vmatprep.subr.mxu0 0.0
        %1986 = vmatpush1.msra.mxu0 0.0
        %1987 = vmatprep.subr.mxu0 0.0
        %1988 = vmatpush1.msra.mxu0 0.0
        %1989 = vmatprep.subr.mxu0 0.0
        %1990 = vmatpush1.msra.mxu0 0.0
        %1991 = vmatprep.subr.mxu0 0.0
        %1992 = vmatpush1.msra.mxu0 0.0
        %1993 = vmatprep.subr.mxu0 0.0
        %1994 = vmatpush1.msra.mxu0 0.0
        %1995 = vmatprep.subr.mxu0 0.0
        %1996 = vmatpush1.msra.mxu0 0.0
        %1997 = vmatprep.subr.mxu0 0.0
        %1998 = vmatpush1.msra.mxu0 0.0
        %1999 = vmatprep.subr.mxu0 0.0
        %2000 = vmatpush1.msra.mxu0 0.0
        %2001 = vmatprep.subr.mxu0 0.0
        %2002 = vmatpush1.msra.mxu0 0.0
        %2003 = vmatprep.subr.mxu0 0.0
        %2004 = vmatpush1.msra.mxu0 0.0
        %2005 = vmatprep.subr.mxu0 0.0
        %2006 = vmatpush1.msra.mxu0 0.0
        %2007 = vmatprep.subr.mxu0 0.0
        %2008 = vmatpush1.msra.mxu0 0.0
        %2009 = vmatprep.subr.mxu0 0.0
        %2010 = vmatpush1.msra.mxu0 0.0
        %2011 = vmatprep.subr.mxu0 0.0
        %2012 = vmatpush1.msra.mxu0 0.0
        %2013 = vmatprep.subr.mxu0 0.0
        %2014 = vmatpush1.msra.mxu0 0.0
        %2015 = vmatprep.subr.mxu0 0.0
        %2016 = vmatpush1.msra.mxu0 0.0
        %2017 = vmatprep.subr.mxu0 0.0
        %2018 = vmatpush1.msra.mxu0 0.0
        %2019 = vmatprep.subr.mxu0 0.0
        %2020 = vmatpush1.msra.mxu0 0.0
        %2021 = vmatprep.subr.mxu0 0.0
        %2022 = vmatpush1.msra.mxu0 0.0
        %2023 = vmatprep.subr.mxu0 0.0
        %2024 = vmatpush1.msra.mxu0 0.0
        %2025 = vmatprep.mubr.f32.mxu0 0.0
        %2026 = vmatmul.mubr.f32.gmra.mrb[0].mxu0 %v1959
        %v2027 = vpop.f32.mrb[0].mxu0
        %v2028 = vadd.f32 0.0, %v2027
        %v2029 = vpop.f32.mrb[0].mxu0
        %2030 = vdwg.mxu0
        %v2031 = vmul.f32 %v2028, %v1954
        %2032 = vrot.lane.b32.xlu0 %v1705, 96
        %v2033 = vpop.permute.xlu0 %2032
        %v2035 = vsel %vm1686, %v2033, 0.0
        %2036 = vadd.xlane.f32.xlu0 %v2035
        %v2037 = vpop.xlane.xlu0 %2036
        %v2038 = vrcp.pop %v2037
        %v2039 = vsel %vm1686, %v2033, 0
        %2041 = vmatprep.subr.mxu0 0.0
        %2042 = vmatpush1.msra.mxu0 %v1037
        %2043 = vmatprep.subr.mxu0 0.0
        %2044 = vmatpush1.msra.mxu0 0.0
        %2045 = vmatprep.subr.mxu0 0.0
        %2046 = vmatpush1.msra.mxu0 0.0
        %2047 = vmatprep.subr.mxu0 0.0
        %2048 = vmatpush1.msra.mxu0 0.0
        %2049 = vmatprep.subr.mxu0 0.0
        %2050 = vmatpush1.msra.mxu0 0.0
        %2051 = vmatprep.subr.mxu0 0.0
        %2052 = vmatpush1.msra.mxu0 0.0
        %2053 = vmatprep.subr.mxu0 0.0
        %2054 = vmatpush1.msra.mxu0 0.0
        %2055 = vmatprep.subr.mxu0 0.0
        %2056 = vmatpush1.msra.mxu0 0.0
        %2057 = vmatprep.subr.mxu0 0.0
        %2058 = vmatpush1.msra.mxu0 0.0
        %2059 = vmatprep.subr.mxu0 0.0
        %2060 = vmatpush1.msra.mxu0 0.0
        %2061 = vmatprep.subr.mxu0 0.0
        %2062 = vmatpush1.msra.mxu0 0.0
        %2063 = vmatprep.subr.mxu0 0.0
        %2064 = vmatpush1.msra.mxu0 0.0
        %2065 = vmatprep.subr.mxu0 0.0
        %2066 = vmatpush1.msra.mxu0 0.0
        %2067 = vmatprep.subr.mxu0 0.0
        %2068 = vmatpush1.msra.mxu0 0.0
        %2069 = vmatprep.subr.mxu0 0.0
        %2070 = vmatpush1.msra.mxu0 0.0
        %2071 = vmatprep.subr.mxu0 0.0
        %2072 = vmatpush1.msra.mxu0 0.0
        %2073 = vmatprep.subr.mxu0 0.0
        %2074 = vmatpush1.msra.mxu0 0.0
        %2075 = vmatprep.subr.mxu0 0.0
        %2076 = vmatpush1.msra.mxu0 0.0
        %2077 = vmatprep.subr.mxu0 0.0
        %2078 = vmatpush1.msra.mxu0 0.0
        %2079 = vmatprep.subr.mxu0 0.0
        %2080 = vmatpush1.msra.mxu0 0.0
        %2081 = vmatprep.subr.mxu0 0.0
        %2082 = vmatpush1.msra.mxu0 0.0
        %2083 = vmatprep.subr.mxu0 0.0
        %2084 = vmatpush1.msra.mxu0 0.0
        %2085 = vmatprep.subr.mxu0 0.0
        %2086 = vmatpush1.msra.mxu0 0.0
        %2087 = vmatprep.subr.mxu0 0.0
        %2088 = vmatpush1.msra.mxu0 0.0
        %2089 = vmatprep.subr.mxu0 0.0
        %2090 = vmatpush1.msra.mxu0 0.0
        %2091 = vmatprep.subr.mxu0 0.0
        %2092 = vmatpush1.msra.mxu0 0.0
        %2093 = vmatprep.subr.mxu0 0.0
        %2094 = vmatpush1.msra.mxu0 0.0
        %2095 = vmatprep.subr.mxu0 0.0
        %2096 = vmatpush1.msra.mxu0 0.0
        %2097 = vmatprep.subr.mxu0 0.0
        %2098 = vmatpush1.msra.mxu0 0.0
        %2099 = vmatprep.subr.mxu0 0.0
        %2100 = vmatpush1.msra.mxu0 0.0
        %2101 = vmatprep.subr.mxu0 0.0
        %2102 = vmatpush1.msra.mxu0 0.0
        %2103 = vmatprep.subr.mxu0 0.0
        %2104 = vmatpush1.msra.mxu0 0.0
        %2105 = vmatprep.mubr.f32.mxu0 0.0
        %2106 = vmatmul.mubr.f32.gmra.mrb[0].mxu0 %v2039
        %v2107 = vpop.f32.mrb[0].mxu0
        %v2108 = vadd.f32 0.0, %v2107
        %v2109 = vpop.f32.mrb[0].mxu0
        %2110 = vdwg.mxu0
        %v2111 = vmul.f32 %v2108, %v2038
        %2112 = vrot.lane.b32.xlu0 %v1705, 88
        %v2113 = vpop.permute.xlu0 %2112
        %v2115 = vsel %vm1686, %v2113, 0.0
        %2116 = vadd.xlane.f32.xlu0 %v2115
        %v2117 = vpop.xlane.xlu0 %2116
        %v2118 = vrcp.pop %v2117
        %2120 = vrot.lane.b32.xlu0 %v1037, 64
        %v2121 = vpop.permute.xlu0 %2120
        %v2123 = vsel %vm1686, %v2113, 0
        %2125 = vmatprep.subr.mxu0 0.0
        %2126 = vmatpush1.msra.mxu0 %v2121
        %2127 = vmatprep.subr.mxu0 0.0
        %2128 = vmatpush1.msra.mxu0 0.0
        %2129 = vmatprep.subr.mxu0 0.0
        %2130 = vmatpush1.msra.mxu0 0.0
        %2131 = vmatprep.subr.mxu0 0.0
        %2132 = vmatpush1.msra.mxu0 0.0
        %2133 = vmatprep.subr.mxu0 0.0
        %2134 = vmatpush1.msra.mxu0 0.0
        %2135 = vmatprep.subr.mxu0 0.0
        %2136 = vmatpush1.msra.mxu0 0.0
        %2137 = vmatprep.subr.mxu0 0.0
        %2138 = vmatpush1.msra.mxu0 0.0
        %2139 = vmatprep.subr.mxu0 0.0
        %2140 = vmatpush1.msra.mxu0 0.0
        %2141 = vmatprep.subr.mxu0 0.0
        %2142 = vmatpush1.msra.mxu0 0.0
        %2143 = vmatprep.subr.mxu0 0.0
        %2144 = vmatpush1.msra.mxu0 0.0
        %2145 = vmatprep.subr.mxu0 0.0
        %2146 = vmatpush1.msra.mxu0 0.0
        %2147 = vmatprep.subr.mxu0 0.0
        %2148 = vmatpush1.msra.mxu0 0.0
        %2149 = vmatprep.subr.mxu0 0.0
        %2150 = vmatpush1.msra.mxu0 0.0
        %2151 = vmatprep.subr.mxu0 0.0
        %2152 = vmatpush1.msra.mxu0 0.0
        %2153 = vmatprep.subr.mxu0 0.0
        %2154 = vmatpush1.msra.mxu0 0.0
        %2155 = vmatprep.subr.mxu0 0.0
        %2156 = vmatpush1.msra.mxu0 0.0
        %2157 = vmatprep.subr.mxu0 0.0
        %2158 = vmatpush1.msra.mxu0 0.0
        %2159 = vmatprep.subr.mxu0 0.0
        %2160 = vmatpush1.msra.mxu0 0.0
        %2161 = vmatprep.subr.mxu0 0.0
        %2162 = vmatpush1.msra.mxu0 0.0
        %2163 = vmatprep.subr.mxu0 0.0
        %2164 = vmatpush1.msra.mxu0 0.0
        %2165 = vmatprep.subr.mxu0 0.0
        %2166 = vmatpush1.msra.mxu0 0.0
        %2167 = vmatprep.subr.mxu0 0.0
        %2168 = vmatpush1.msra.mxu0 0.0
        %2169 = vmatprep.subr.mxu0 0.0
        %2170 = vmatpush1.msra.mxu0 0.0
        %2171 = vmatprep.subr.mxu0 0.0
        %2172 = vmatpush1.msra.mxu0 0.0
        %2173 = vmatprep.subr.mxu0 0.0
        %2174 = vmatpush1.msra.mxu0 0.0
        %2175 = vmatprep.subr.mxu0 0.0
        %2176 = vmatpush1.msra.mxu0 0.0
        %2177 = vmatprep.subr.mxu0 0.0
        %2178 = vmatpush1.msra.mxu0 0.0
        %2179 = vmatprep.subr.mxu0 0.0
        %2180 = vmatpush1.msra.mxu0 0.0
        %2181 = vmatprep.subr.mxu0 0.0
        %2182 = vmatpush1.msra.mxu0 0.0
        %2183 = vmatprep.subr.mxu0 0.0
        %2184 = vmatpush1.msra.mxu0 0.0
        %2185 = vmatprep.subr.mxu0 0.0
        %2186 = vmatpush1.msra.mxu0 0.0
        %2187 = vmatprep.subr.mxu0 0.0
        %2188 = vmatpush1.msra.mxu0 0.0
        %2189 = vmatprep.mubr.f32.mxu0 0.0
        %2190 = vmatmul.mubr.f32.gmra.mrb[0].mxu0 %v2123
        %v2191 = vpop.f32.mrb[0].mxu0
        %v2192 = vadd.f32 0.0, %v2191
        %v2193 = vpop.f32.mrb[0].mxu0
        %2194 = vdwg.mxu0
        %v2195 = vmul.f32 %v2192, %v2118
        %2196 = vrot.lane.b32.xlu0 %v1705, 80
        %v2197 = vpop.permute.xlu0 %2196
        %v2199 = vsel %vm1686, %v2197, 0.0
        %2200 = vadd.xlane.f32.xlu0 %v2199
        %v2201 = vpop.xlane.xlu0 %2200
        %v2202 = vrcp.pop %v2201
        %v2203 = vsel %vm1686, %v2197, 0
        %2205 = vmatprep.subr.mxu0 0.0
        %2206 = vmatpush1.msra.mxu0 %v1039
        %2207 = vmatprep.subr.mxu0 0.0
        %2208 = vmatpush1.msra.mxu0 0.0
        %2209 = vmatprep.subr.mxu0 0.0
        %2210 = vmatpush1.msra.mxu0 0.0
        %2211 = vmatprep.subr.mxu0 0.0
        %2212 = vmatpush1.msra.mxu0 0.0
        %2213 = vmatprep.subr.mxu0 0.0
        %2214 = vmatpush1.msra.mxu0 0.0
        %2215 = vmatprep.subr.mxu0 0.0
        %2216 = vmatpush1.msra.mxu0 0.0
        %2217 = vmatprep.subr.mxu0 0.0
        %2218 = vmatpush1.msra.mxu0 0.0
        %2219 = vmatprep.subr.mxu0 0.0
        %2220 = vmatpush1.msra.mxu0 0.0
        %2221 = vmatprep.subr.mxu0 0.0
        %2222 = vmatpush1.msra.mxu0 0.0
        %2223 = vmatprep.subr.mxu0 0.0
        %2224 = vmatpush1.msra.mxu0 0.0
        %2225 = vmatprep.subr.mxu0 0.0
        %2226 = vmatpush1.msra.mxu0 0.0
        %2227 = vmatprep.subr.mxu0 0.0
        %2228 = vmatpush1.msra.mxu0 0.0
        %2229 = vmatprep.subr.mxu0 0.0
        %2230 = vmatpush1.msra.mxu0 0.0
        %2231 = vmatprep.subr.mxu0 0.0
        %2232 = vmatpush1.msra.mxu0 0.0
        %2233 = vmatprep.subr.mxu0 0.0
        %2234 = vmatpush1.msra.mxu0 0.0
        %2235 = vmatprep.subr.mxu0 0.0
        %2236 = vmatpush1.msra.mxu0 0.0
        %2237 = vmatprep.subr.mxu0 0.0
        %2238 = vmatpush1.msra.mxu0 0.0
        %2239 = vmatprep.subr.mxu0 0.0
        %2240 = vmatpush1.msra.mxu0 0.0
        %2241 = vmatprep.subr.mxu0 0.0
        %2242 = vmatpush1.msra.mxu0 0.0
        %2243 = vmatprep.subr.mxu0 0.0
        %2244 = vmatpush1.msra.mxu0 0.0
        %2245 = vmatprep.subr.mxu0 0.0
        %2246 = vmatpush1.msra.mxu0 0.0
        %2247 = vmatprep.subr.mxu0 0.0
        %2248 = vmatpush1.msra.mxu0 0.0
        %2249 = vmatprep.subr.mxu0 0.0
        %2250 = vmatpush1.msra.mxu0 0.0
        %2251 = vmatprep.subr.mxu0 0.0
        %2252 = vmatpush1.msra.mxu0 0.0
        %2253 = vmatprep.subr.mxu0 0.0
        %2254 = vmatpush1.msra.mxu0 0.0
        %2255 = vmatprep.subr.mxu0 0.0
        %2256 = vmatpush1.msra.mxu0 0.0
        %2257 = vmatprep.subr.mxu0 0.0
        %2258 = vmatpush1.msra.mxu0 0.0
        %2259 = vmatprep.subr.mxu0 0.0
        %2260 = vmatpush1.msra.mxu0 0.0
        %2261 = vmatprep.subr.mxu0 0.0
        %2262 = vmatpush1.msra.mxu0 0.0
        %2263 = vmatprep.subr.mxu0 0.0
        %2264 = vmatpush1.msra.mxu0 0.0
        %2265 = vmatprep.subr.mxu0 0.0
        %2266 = vmatpush1.msra.mxu0 0.0
        %2267 = vmatprep.subr.mxu0 0.0
        %2268 = vmatpush1.msra.mxu0 0.0
        %2269 = vmatprep.mubr.f32.mxu0 0.0
        %2270 = vmatmul.mubr.f32.gmra.mrb[0].mxu0 %v2203
        %v2271 = vpop.f32.mrb[0].mxu0
        %v2272 = vadd.f32 0.0, %v2271
        %v2273 = vpop.f32.mrb[0].mxu0
        %2274 = vdwg.mxu0
        %v2275 = vmul.f32 %v2272, %v2202
        %2276 = vrot.lane.b32.xlu0 %v1705, 72
        %v2277 = vpop.permute.xlu0 %2276
        %v2279 = vsel %vm1686, %v2277, 0.0
        %2280 = vadd.xlane.f32.xlu0 %v2279
        %v2281 = vpop.xlane.xlu0 %2280
        %v2282 = vrcp.pop %v2281
        %2284 = vrot.lane.b32.xlu0 %v1039, 64
        %v2285 = vpop.permute.xlu0 %2284
        %v2287 = vsel %vm1686, %v2277, 0
        %2289 = vmatprep.subr.mxu0 0.0
        %2290 = vmatpush1.msra.mxu0 %v2285
        %2291 = vmatprep.subr.mxu0 0.0
        %2292 = vmatpush1.msra.mxu0 0.0
        %2293 = vmatprep.subr.mxu0 0.0
        %2294 = vmatpush1.msra.mxu0 0.0
        %2295 = vmatprep.subr.mxu0 0.0
        %2296 = vmatpush1.msra.mxu0 0.0
        %2297 = vmatprep.subr.mxu0 0.0
        %2298 = vmatpush1.msra.mxu0 0.0
        %2299 = vmatprep.subr.mxu0 0.0
        %2300 = vmatpush1.msra.mxu0 0.0
        %2301 = vmatprep.subr.mxu0 0.0
        %2302 = vmatpush1.msra.mxu0 0.0
        %2303 = vmatprep.subr.mxu0 0.0
        %2304 = vmatpush1.msra.mxu0 0.0
        %2305 = vmatprep.subr.mxu0 0.0
        %2306 = vmatpush1.msra.mxu0 0.0
        %2307 = vmatprep.subr.mxu0 0.0
        %2308 = vmatpush1.msra.mxu0 0.0
        %2309 = vmatprep.subr.mxu0 0.0
        %2310 = vmatpush1.msra.mxu0 0.0
        %2311 = vmatprep.subr.mxu0 0.0
        %2312 = vmatpush1.msra.mxu0 0.0
        %2313 = vmatprep.subr.mxu0 0.0
        %2314 = vmatpush1.msra.mxu0 0.0
        %2315 = vmatprep.subr.mxu0 0.0
        %2316 = vmatpush1.msra.mxu0 0.0
        %2317 = vmatprep.subr.mxu0 0.0
        %2318 = vmatpush1.msra.mxu0 0.0
        %2319 = vmatprep.subr.mxu0 0.0
        %2320 = vmatpush1.msra.mxu0 0.0
        %2321 = vmatprep.subr.mxu0 0.0
        %2322 = vmatpush1.msra.mxu0 0.0
        %2323 = vmatprep.subr.mxu0 0.0
        %2324 = vmatpush1.msra.mxu0 0.0
        %2325 = vmatprep.subr.mxu0 0.0
        %2326 = vmatpush1.msra.mxu0 0.0
        %2327 = vmatprep.subr.mxu0 0.0
        %2328 = vmatpush1.msra.mxu0 0.0
        %2329 = vmatprep.subr.mxu0 0.0
        %2330 = vmatpush1.msra.mxu0 0.0
        %2331 = vmatprep.subr.mxu0 0.0
        %2332 = vmatpush1.msra.mxu0 0.0
        %2333 = vmatprep.subr.mxu0 0.0
        %2334 = vmatpush1.msra.mxu0 0.0
        %2335 = vmatprep.subr.mxu0 0.0
        %2336 = vmatpush1.msra.mxu0 0.0
        %2337 = vmatprep.subr.mxu0 0.0
        %2338 = vmatpush1.msra.mxu0 0.0
        %2339 = vmatprep.subr.mxu0 0.0
        %2340 = vmatpush1.msra.mxu0 0.0
        %2341 = vmatprep.subr.mxu0 0.0
        %2342 = vmatpush1.msra.mxu0 0.0
        %2343 = vmatprep.subr.mxu0 0.0
        %2344 = vmatpush1.msra.mxu0 0.0
        %2345 = vmatprep.subr.mxu0 0.0
        %2346 = vmatpush1.msra.mxu0 0.0
        %2347 = vmatprep.subr.mxu0 0.0
        %2348 = vmatpush1.msra.mxu0 0.0
        %2349 = vmatprep.subr.mxu0 0.0
        %2350 = vmatpush1.msra.mxu0 0.0
        %2351 = vmatprep.subr.mxu0 0.0
        %2352 = vmatpush1.msra.mxu0 0.0
        %2353 = vmatprep.mubr.f32.mxu0 0.0
        %2354 = vmatmul.mubr.f32.gmra.mrb[0].mxu0 %v2287
        %v2355 = vpop.f32.mrb[0].mxu0
        %v2356 = vadd.f32 0.0, %v2355
        %v2357 = vpop.f32.mrb[0].mxu0
        %2358 = vdwg.mxu0
        %v2359 = vmul.f32 %v2356, %v2282
        %2361 = vrot.lane.b32.xlu0 %v1867, 64
        %v2362 = vpop.permute.xlu0 %2361
        %2365 = vrot.lane.b32.xlu0 %v2031, 64
        %v2366 = vpop.permute.xlu0 %2365
        %2369 = vrot.lane.b32.xlu0 %v2195, 64
        %v2370 = vpop.permute.xlu0 %2369
        %2373 = vrot.lane.b32.xlu0 %v2359, 64
        %v2374 = vpop.permute.xlu0 %2373
        %v2376 = vsel %vm1041, %v1783, %v2362
        %v2377 = vsel %vm1041, %v1947, %v2366
        %v2378 = vsel %vm1041, %v2111, %v2370
        %v2379 = vsel %vm1041, %v2275, %v2374
        %2380 = vmatprep.subr.mxu0 0.0
        %2381 = vmatpush1.msra.mxu0 %v551
        %2382 = vmatprep.subr.mxu0 0.0
        %2383 = vmatpush1.msra.mxu0 %v552
        %2384 = vmatprep.subr.mxu0 0.0
        %2385 = vmatpush1.msra.mxu0 %v553
        %2386 = vmatprep.subr.mxu0 0.0
        %2387 = vmatpush1.msra.mxu0 %v554
        %2388 = vmatprep.subr.mxu0 0.0
        %2389 = vmatpush1.msra.mxu0 %v555
        %2390 = vmatprep.subr.mxu0 0.0
        %2391 = vmatpush1.msra.mxu0 %v556
        %2392 = vmatprep.subr.mxu0 0.0
        %2393 = vmatpush1.msra.mxu0 %v557
        %2394 = vmatprep.subr.mxu0 0.0
        %2395 = vmatpush1.msra.mxu0 %v558
        %2396 = vmatprep.subr.mxu0 0.0
        %2397 = vmatpush1.msra.mxu0 %v559
        %2398 = vmatprep.subr.mxu0 0.0
        %2399 = vmatpush1.msra.mxu0 %v560
        %2400 = vmatprep.subr.mxu0 0.0
        %2401 = vmatpush1.msra.mxu0 %v561
        %2402 = vmatprep.subr.mxu0 0.0
        %2403 = vmatpush1.msra.mxu0 %v562
        %2404 = vmatprep.subr.mxu0 0.0
        %2405 = vmatpush1.msra.mxu0 %v563
        %2406 = vmatprep.subr.mxu0 0.0
        %2407 = vmatpush1.msra.mxu0 %v564
        %2408 = vmatprep.subr.mxu0 0.0
        %2409 = vmatpush1.msra.mxu0 %v565
        %2410 = vmatprep.subr.mxu0 0.0
        %2411 = vmatpush1.msra.mxu0 %v566
        %2412 = vmatprep.subr.mxu0 0.0
        %2413 = vmatpush1.msra.mxu0 %v567
        %2414 = vmatprep.subr.mxu0 0.0
        %2415 = vmatpush1.msra.mxu0 %v568
        %2416 = vmatprep.subr.mxu0 0.0
        %2417 = vmatpush1.msra.mxu0 %v569
        %2418 = vmatprep.subr.mxu0 0.0
        %2419 = vmatpush1.msra.mxu0 %v570
        %2420 = vmatprep.subr.mxu0 0.0
        %2421 = vmatpush1.msra.mxu0 %v571
        %2422 = vmatprep.subr.mxu0 0.0
        %2423 = vmatpush1.msra.mxu0 %v572
        %2424 = vmatprep.subr.mxu0 0.0
        %2425 = vmatpush1.msra.mxu0 %v573
        %2426 = vmatprep.subr.mxu0 0.0
        %2427 = vmatpush1.msra.mxu0 %v574
        %2428 = vmatprep.subr.mxu0 0.0
        %2429 = vmatpush1.msra.mxu0 %v575
        %2430 = vmatprep.subr.mxu0 0.0
        %2431 = vmatpush1.msra.mxu0 %v576
        %2432 = vmatprep.subr.mxu0 0.0
        %2433 = vmatpush1.msra.mxu0 %v577
        %2434 = vmatprep.subr.mxu0 0.0
        %2435 = vmatpush1.msra.mxu0 %v578
        %2436 = vmatprep.subr.mxu0 0.0
        %2437 = vmatpush1.msra.mxu0 %v579
        %2438 = vmatprep.subr.mxu0 0.0
        %2439 = vmatpush1.msra.mxu0 %v580
        %2440 = vmatprep.subr.mxu0 0.0
        %2441 = vmatpush1.msra.mxu0 %v581
        %2442 = vmatprep.subr.mxu0 0.0
        %2443 = vmatpush1.msra.mxu0 %v582
        %2444 = vmatprep.mubr.f32.mxu0 %v2377
        %2445 = vmatmul.mubr.f32.gmra.mrb[0].mxu0 %v2376
        %v2446 = vpop.f32.mrb[0].mxu0
        %v2447 = vadd.f32 0.0, %v2446
        %v2448 = vpop.f32.mrb[0].mxu0
        %2449 = vdwg.mxu0
        %2450 = vmatprep.subr.mxu0 0.0
        %2451 = vmatpush1.msra.mxu0 %v583
        %2452 = vmatprep.subr.mxu0 0.0
        %2453 = vmatpush1.msra.mxu0 %v584
        %2454 = vmatprep.subr.mxu0 0.0
        %2455 = vmatpush1.msra.mxu0 %v585
        %2456 = vmatprep.subr.mxu0 0.0
        %2457 = vmatpush1.msra.mxu0 %v586
        %2458 = vmatprep.subr.mxu0 0.0
        %2459 = vmatpush1.msra.mxu0 %v587
        %2460 = vmatprep.subr.mxu0 0.0
        %2461 = vmatpush1.msra.mxu0 %v588
        %2462 = vmatprep.subr.mxu0 0.0
        %2463 = vmatpush1.msra.mxu0 %v589
        %2464 = vmatprep.subr.mxu0 0.0
        %2465 = vmatpush1.msra.mxu0 %v590
        %2466 = vmatprep.subr.mxu0 0.0
        %2467 = vmatpush1.msra.mxu0 %v591
        %2468 = vmatprep.subr.mxu0 0.0
        %2469 = vmatpush1.msra.mxu0 %v592
        %2470 = vmatprep.subr.mxu0 0.0
        %2471 = vmatpush1.msra.mxu0 %v593
        %2472 = vmatprep.subr.mxu0 0.0
        %2473 = vmatpush1.msra.mxu0 %v594
        %2474 = vmatprep.subr.mxu0 0.0
        %2475 = vmatpush1.msra.mxu0 %v595
        %2476 = vmatprep.subr.mxu0 0.0
        %2477 = vmatpush1.msra.mxu0 %v596
        %2478 = vmatprep.subr.mxu0 0.0
        %2479 = vmatpush1.msra.mxu0 %v597
        %2480 = vmatprep.subr.mxu0 0.0
        %2481 = vmatpush1.msra.mxu0 %v598
        %2482 = vmatprep.subr.mxu0 0.0
        %2483 = vmatpush1.msra.mxu0 %v599
        %2484 = vmatprep.subr.mxu0 0.0
        %2485 = vmatpush1.msra.mxu0 %v600
        %2486 = vmatprep.subr.mxu0 0.0
        %2487 = vmatpush1.msra.mxu0 %v601
        %2488 = vmatprep.subr.mxu0 0.0
        %2489 = vmatpush1.msra.mxu0 %v602
        %2490 = vmatprep.subr.mxu0 0.0
        %2491 = vmatpush1.msra.mxu0 %v603
        %2492 = vmatprep.subr.mxu0 0.0
        %2493 = vmatpush1.msra.mxu0 %v604
        %2494 = vmatprep.subr.mxu0 0.0
        %2495 = vmatpush1.msra.mxu0 %v605
        %2496 = vmatprep.subr.mxu0 0.0
        %2497 = vmatpush1.msra.mxu0 %v606
        %2498 = vmatprep.subr.mxu0 0.0
        %2499 = vmatpush1.msra.mxu0 %v607
        %2500 = vmatprep.subr.mxu0 0.0
        %2501 = vmatpush1.msra.mxu0 %v608
        %2502 = vmatprep.subr.mxu0 0.0
        %2503 = vmatpush1.msra.mxu0 %v609
        %2504 = vmatprep.subr.mxu0 0.0
        %2505 = vmatpush1.msra.mxu0 %v610
        %2506 = vmatprep.subr.mxu0 0.0
        %2507 = vmatpush1.msra.mxu0 %v611
        %2508 = vmatprep.subr.mxu0 0.0
        %2509 = vmatpush1.msra.mxu0 %v612
        %2510 = vmatprep.subr.mxu0 0.0
        %2511 = vmatpush1.msra.mxu0 %v613
        %2512 = vmatprep.subr.mxu0 0.0
        %2513 = vmatpush1.msra.mxu0 %v614
        %2514 = vmatprep.mubr.f32.mxu0 %v2379
        %2515 = vmatmul.mubr.f32.gmra.mrb[0].mxu0 %v2378
        %v2516 = vpop.f32.mrb[0].mxu0
        %v2517 = vadd.f32 %v2447, %v2516
        %v2518 = vpop.f32.mrb[0].mxu0
        %2519 = vdwg.mxu0
        %2520 = vst [vmem:[%s350] sm:$0xff] %v2517
        %v2521 = vld [vmem:[%s315] sm:$0xff]
        %v2522 = vld [vmem:[#allocation10] sm:$0xff]
        %v2523 = vld [vmem:[#allocation10 + $0x8] sm:$0xff]
        %v2524 = vld [vmem:[#allocation10 + $0x10] sm:$0xff]
        %v2525 = vld [vmem:[#allocation10 + $0x18] sm:$0xff]
        %v2526 = vld [vmem:[#allocation10 + $0x20] sm:$0xff]
        %v2527 = vld [vmem:[#allocation10 + $0x28] sm:$0xff]
        %v2528 = vld [vmem:[#allocation10 + $0x30] sm:$0xff]
        %v2529 = vld [vmem:[#allocation10 + $0x38] sm:$0xff]
        %v2530 = vld [vmem:[#allocation10 + $0x40] sm:$0xff]
        %v2531 = vld [vmem:[#allocation10 + $0x48] sm:$0xff]
        %v2532 = vld [vmem:[#allocation10 + $0x50] sm:$0xff]
        %v2533 = vld [vmem:[#allocation10 + $0x58] sm:$0xff]
        %v2534 = vld [vmem:[#allocation10 + $0x60] sm:$0xff]
        %v2535 = vld [vmem:[#allocation10 + $0x68] sm:$0xff]
        %v2536 = vld [vmem:[#allocation10 + $0x70] sm:$0xff]
        %v2537 = vld [vmem:[#allocation10 + $0x78] sm:$0xff]
        %2538 = vmatprep.subr.mxu0 0.0
        %2539 = vmatpush1.msra.mxu0 %v2522
        %2540 = vmatprep.subr.mxu0 0.0
        %2541 = vmatpush1.msra.mxu0 %v2523
        %2542 = vmatprep.subr.mxu0 0.0
        %2543 = vmatpush1.msra.mxu0 %v2524
        %2544 = vmatprep.subr.mxu0 0.0
        %2545 = vmatpush1.msra.mxu0 %v2525
        %2546 = vmatprep.subr.mxu0 0.0
        %2547 = vmatpush1.msra.mxu0 %v2526
        %2548 = vmatprep.subr.mxu0 0.0
        %2549 = vmatpush1.msra.mxu0 %v2527
        %2550 = vmatprep.subr.mxu0 0.0
        %2551 = vmatpush1.msra.mxu0 %v2528
        %2552 = vmatprep.subr.mxu0 0.0
        %2553 = vmatpush1.msra.mxu0 %v2529
        %2554 = vmatprep.subr.mxu0 0.0
        %2555 = vmatpush1.msra.mxu0 %v2530
        %2556 = vmatprep.subr.mxu0 0.0
        %2557 = vmatpush1.msra.mxu0 %v2531
        %2558 = vmatprep.subr.mxu0 0.0
        %2559 = vmatpush1.msra.mxu0 %v2532
        %2560 = vmatprep.subr.mxu0 0.0
        %2561 = vmatpush1.msra.mxu0 %v2533
        %2562 = vmatprep.subr.mxu0 0.0
        %2563 = vmatpush1.msra.mxu0 %v2534
        %2564 = vmatprep.subr.mxu0 0.0
        %2565 = vmatpush1.msra.mxu0 %v2535
        %2566 = vmatprep.subr.mxu0 0.0
        %2567 = vmatpush1.msra.mxu0 %v2536
        %2568 = vmatprep.subr.mxu0 0.0
        %2569 = vmatpush1.msra.mxu0 %v2537
        %2570 = vmatprep.subr.mxu0 0.0
        %2571 = vmatpush1.msra.mxu0 0.0
        %2572 = vmatprep.subr.mxu0 0.0
        %2573 = vmatpush1.msra.mxu0 0.0
        %2574 = vmatprep.subr.mxu0 0.0
        %2575 = vmatpush1.msra.mxu0 0.0
        %2576 = vmatprep.subr.mxu0 0.0
        %2577 = vmatpush1.msra.mxu0 0.0
        %2578 = vmatprep.subr.mxu0 0.0
        %2579 = vmatpush1.msra.mxu0 0.0
        %2580 = vmatprep.subr.mxu0 0.0
        %2581 = vmatpush1.msra.mxu0 0.0
        %2582 = vmatprep.subr.mxu0 0.0
        %2583 = vmatpush1.msra.mxu0 0.0
        %2584 = vmatprep.subr.mxu0 0.0
        %2585 = vmatpush1.msra.mxu0 0.0
        %2586 = vmatprep.subr.mxu0 0.0
        %2587 = vmatpush1.msra.mxu0 0.0
        %2588 = vmatprep.subr.mxu0 0.0
        %2589 = vmatpush1.msra.mxu0 0.0
        %2590 = vmatprep.subr.mxu0 0.0
        %2591 = vmatpush1.msra.mxu0 0.0
        %2592 = vmatprep.subr.mxu0 0.0
        %2593 = vmatpush1.msra.mxu0 0.0
        %2594 = vmatprep.subr.mxu0 0.0
        %2595 = vmatpush1.msra.mxu0 0.0
        %2596 = vmatprep.subr.mxu0 0.0
        %2597 = vmatpush1.msra.mxu0 0.0
        %2598 = vmatprep.subr.mxu0 0.0
        %2599 = vmatpush1.msra.mxu0 0.0
        %2600 = vmatprep.subr.mxu0 0.0
        %2601 = vmatpush1.msra.mxu0 0.0
        %2602 = vmatprep.mubr.f32.mxu0 0.0
        %2603 = vmatmul.mubr.f32.gmra.mrb[0].mxu0 %v2521
        %v2604 = vpop.f32.mrb[0].mxu0
        %v2605 = vadd.f32 0.0, %v2604
        %v2606 = vpop.f32.mrb[0].mxu0
        %2607 = vdwg.mxu0
        %2608 = vst [vmem:[%s357] sm:$0xff] %v2605
        %s2609 = sand.u32 %s154, 1
        %s2610 = scalar_lea.sflag [#allocation4], %s2609
        %s2611 = sand.u32 %s154, 1
        %s2612 = smul.addr %s2611, 8
        %s2613 = scalar_lea.vmem [#allocation11], %s2612
        %s2614 = sand.u32 %s180, 1
        %s2615 = scalar_lea.sflag [#allocation13], %s2614
        %s2616 = sand.u32 %s180, 1
        %s2617 = smul.addr %s2616, 8
        %s2618 = scalar_lea.vmem [#allocation12], %s2617
        // Predicated region
        $region61: #{tpu_custom_call.1} parent=39 // pred_check
          %p2619 = pneg %p164
        $region62: #{tpu_custom_call.1} parent=39 // pred_check_branch
          %2621 = sbr.rel (%p2619) target = $region64
        $region63: #{tpu_custom_call.1} parent=39 // pred_region
          %s2623 = ssub.s32 128, 128
          %2624 = vsyncadd %s2610, %s2623
          %s2625 = smul.addr %s31, 128
          %s2626 = scalar_lea.hbm %s5, %s2625
          %s2628 = sshll.u32 %s2613, 4
          %s2629 = int_to_ptr.vmem [resolvable:$true] %s2628
          %2631 = dma.vmem_to_hbm [thread:$0]  %s2629, 128, %s2626, %s2610
        $region64: #{tpu_custom_call.1} parent=39 // pred_fallthru
          _
        // Predicated region
        $region65: #{tpu_custom_call.1} parent=39 // pred_check
          %p2632 = pneg %p190
        $region66: #{tpu_custom_call.1} parent=39 // pred_check_branch
          %2634 = sbr.rel (%p2632) target = $region68
        $region67: #{tpu_custom_call.1} parent=39 // pred_region
          %s2636 = ssub.s32 128, 128
          %2637 = vsyncadd %s2615, %s2636
          %s2638 = smul.addr %s31, 128
          %s2639 = scalar_lea.hbm %s6, %s2638
          %s2641 = sshll.u32 %s2618, 4
          %s2642 = int_to_ptr.vmem [resolvable:$true] %s2641
          %2644 = dma.vmem_to_hbm [thread:$0]  %s2642, 128, %s2639, %s2615
        $region68: #{tpu_custom_call.1} parent=39 // pred_fallthru
          _
      $region40: #{tpu_custom_call.1} parent=5 // pred_fallthru
        _
      %p2645 = scmp.le.s32.totalorder 2, %s26
      // Predicated region
      $region69: #{tpu_custom_call.1} parent=5 // pred_check
        %p2646 = pneg %p2645
      $region70: #{tpu_custom_call.1} parent=5 // pred_check_branch
        %2648 = sbr.rel (%p2646) target = $region72
      $region71: #{tpu_custom_call.1} parent=5 // pred_region
        %s2649 = ssub.s32 %s26, 2
        // Predicated region
        $region73: #{tpu_custom_call.1} parent=71 // pred_check
          %p2650 = pneg %p170
        $region74: #{tpu_custom_call.1} parent=71 // pred_check_branch
          %2652 = sbr.rel (%p2650) target = $region76
        $region75: #{tpu_custom_call.1} parent=71 // pred_region
          %s2653 = sand.u32 %s155, 1
          %s2654 = scalar_lea.sflag [#allocation4], %s2653
          %s2655 = sand.u32 %s155, 1
          %s2656 = smul.addr %s2655, 8
          %s2657 = scalar_lea.vmem [#allocation11], %s2656
          %2658 = dma.done %s2654, 128
        $region76: #{tpu_custom_call.1} parent=71 // pred_fallthru
          _
        // Predicated region
        $region77: #{tpu_custom_call.1} parent=71 // pred_check
          %p2659 = pneg %p196
        $region78: #{tpu_custom_call.1} parent=71 // pred_check_branch
          %2661 = sbr.rel (%p2659) target = $region80
        $region79: #{tpu_custom_call.1} parent=71 // pred_region
          %s2662 = sand.u32 %s181, 1
          %s2663 = scalar_lea.sflag [#allocation13], %s2662
          %s2664 = sand.u32 %s181, 1
          %s2665 = smul.addr %s2664, 8
          %s2666 = scalar_lea.vmem [#allocation12], %s2665
          %2667 = dma.done %s2663, 128
        $region80: #{tpu_custom_call.1} parent=71 // pred_fallthru
          _
      $region72: #{tpu_custom_call.1} parent=5 // pred_fallthru
        _
    $region6: #{tpu_custom_call.1} parent=1 // loop_footer
      %s30 = sadd.s32 1, %s26
    $region7: #{tpu_custom_call.1} parent=1 // loop_footer_branch
      %25 = sbr.rel target = $region3
    $region8: #{tpu_custom_call.1} parent=1 // loop_exit
      _
    %2668 = vsyncpa [#allocation3], 1
    %s2669 = scalar_lea.sflag [#allocation3], 1
    %2670 = vsyncpa %s2669, 1
    %2671 = vsyncpa [#allocation6], 1
    %2672 = vsyncpa [#allocation9], 1
    %s2673 = scalar_lea.sflag [#allocation9], 1
    %2674 = vsyncpa %s2673, 1
    %2675 = vsyncpa [#allocation4], 1
    %s2676 = scalar_lea.sflag [#allocation4], 1
    %2677 = vsyncpa %s2676, 1
    %2678 = vsyncpa [#allocation13], 1
    %s2679 = scalar_lea.sflag [#allocation13], 1
    %2680 = vsyncpa %s2679, 1

</llo_original>
